<compile_context>
chip_gen: v6e
topology: v6e:2x2x1
jax: 0.10.0
libtpu: 0.0.40
codegen_flags: <defaults>
</compile_context>

<pallas_src>
import math
import functools

import jax
import jax.numpy as jnp
from jax.experimental import pallas as pl
from jax.experimental.pallas import tpu as pltpu


# --------------------------------------------------------------------------
# Generation-dependent defaults
# --------------------------------------------------------------------------
def _default_tile():
    """256 q/kv tiles on v6e/v7x (2x256 MXU), 128 elsewhere (v5e/v4)."""
    try:
        kind = jax.devices()[0].device_kind.lower()
        if "v6" in kind or "v7" in kind:
            return 256
        return 128
    except Exception:
        return 128


def _default_vmem_limit():
    """Scoped VMEM limit = physical capacity minus ~16 MiB headroom."""
    try:
        cap = int(pltpu.get_tpu_info().vmem_capacity_bytes)
        return max(32 * 1024 * 1024, cap - 16 * 1024 * 1024)
    except Exception:
        return 32 * 1024 * 1024  # conservative fallback (old default)


# --------------------------------------------------------------------------
# Kernel 1: fused Q/K/V projection into head-major (B, H, S, d_k) layout.
# Grid = (batch, seq_tiles).  Per-head matmuls with head-major weights, so
# the head split never touches lane-unaligned slices of a value.
# --------------------------------------------------------------------------
def _qkv_proj_kernel(xq_ref, xk_ref, xv_ref,
                     wq_ref, wk_ref, wv_ref,
                     bq_ref, bk_ref, bv_ref,
                     q_out, k_out, v_out,
                     *, num_heads: int, compute_dtype):
    xq = xq_ref[0].astype(compute_dtype)          # (ts, D)
    xk = xk_ref[0].astype(compute_dtype)
    xv = xv_ref[0].astype(compute_dtype)
    for h in range(num_heads):                    # static unrolled loop over heads
        q_out[0, h] = (jnp.dot(xq, wq_ref[h], preferred_element_type=jnp.float32)
                       + bq_ref[h]).astype(q_out.dtype)
        k_out[0, h] = (jnp.dot(xk, wk_ref[h], preferred_element_type=jnp.float32)
                       + bk_ref[h]).astype(k_out.dtype)
        v_out[0, h] = (jnp.dot(xv, wv_ref[h], preferred_element_type=jnp.float32)
                       + bv_ref[h]).astype(v_out.dtype)


# --------------------------------------------------------------------------
# Kernel 2: flash-style attention + fused output projection.
# Grid = (batch, q_tiles, kv_tiles); kv axis is the reduction axis
# ("arbitrary", innermost).  Online-softmax accumulators (f32) in VMEM.
# --------------------------------------------------------------------------
def _mhsa_flash_kernel(q_ref, k_ref, v_ref, wo_ref, bo_ref,
                       o_ref,
                       m_sc, l_sc, acc_sc,
                       *, num_heads: int, d_model: int, block_q: int,
                       compute_dtype):
    ki = pl.program_id(2)

    @pl.when(ki == 0)
    def _init():
        m_sc[...] = jnp.full(m_sc.shape, -jnp.inf, jnp.float32)
        l_sc[...] = jnp.zeros(l_sc.shape, jnp.float32)
        acc_sc[...] = jnp.zeros(acc_sc.shape, jnp.float32)

    # Already-projected, head-major, compute_dtype tiles (scale folded into Wq).
    q = q_ref[0]                                   # (H, tq, d_k)
    k = k_ref[0]                                   # (H, tk, d_k)
    v = v_ref[0]                                   # (H, tk, d_k)

    # Batched-over-heads scores, contracting d_k (no explicit K^T).
    s = jnp.einsum("hqd,hkd->hqk", q, k,
                   preferred_element_type=jnp.float32)             # (H, tq, tk) f32

    # Online softmax update (all elementwise math in f32 -- v5e safe).
    m_prev = m_sc[...]                                             # (H, tq, 1)
    m_new = jnp.maximum(m_prev, jnp.max(s, axis=-1, keepdims=True))
    alpha = jnp.exp(m_prev - m_new)
    p = jnp.exp(s - m_new)                                         # (H, tq, tk)
    l_sc[...] = alpha * l_sc[...] + jnp.sum(p, axis=-1, keepdims=True)
    acc_sc[...] = alpha * acc_sc[...] + jnp.einsum(
        "hqk,hkd->hqd", p.astype(compute_dtype), v,
        preferred_element_type=jnp.float32)                        # (H, tq, d_k)
    m_sc[...] = m_new

    # Last kv tile: normalize and apply the output projection as a per-head
    # accumulated sum (static slices of head-major Wo; no lane concatenation).
    @pl.when(ki == pl.num_programs(2) - 1)
    def _finalize():
        # exact reciprocal: runs once per q tile, off the hot loop
        ctx = acc_sc[...] * pl.reciprocal(l_sc[...], approx=False)  # (H, tq, d_k)
        out = jnp.zeros((block_q, d_model), jnp.float32)
        for h in range(num_heads):
            out = out + jnp.dot(ctx[h].astype(compute_dtype), wo_ref[h],
                                preferred_element_type=jnp.float32)
        o_ref[0] = (out + bo_ref[...]).astype(o_ref.dtype)


# --------------------------------------------------------------------------
# Wrapper
# --------------------------------------------------------------------------
def multihead_self_attention(query, key, value, params, *, num_heads: int,
                             block_q=None, block_k=None,
                             compute_dtype=jnp.bfloat16):
    """query/key/value: (B, S, D) float32. params: PyTorch-convention weights."""
    B, S, D = query.shape
    assert D % num_heads == 0
    d_k = D // num_heads
    scale = 1.0 / math.sqrt(d_k)

    tile = _default_tile()
    tq = min(S, tile) if block_q is None else block_q
    tk = min(S, tile) if block_k is None else block_k
    assert S % tq == 0 and S % tk == 0, "sequence length must tile evenly"
    tp = tq  # projection-kernel sequence tile

    vmem_limit = _default_vmem_limit()

    # ---- weight prep (PyTorch: W is [out, in], y = x @ W.T + b) ----
    def w_head_major(w):              # -> (H, D, d_k): [in, out] split per head
        return jnp.asarray(w).T.reshape(D, num_heads, d_k).transpose(1, 0, 2)

    def b_head_major(b):              # -> (H, 1, d_k)
        return jnp.asarray(b).reshape(num_heads, 1, d_k)

    # Fold the 1/sqrt(d_k) score scale into Wq/bq once; bf16 MXU operands,
    # f32 biases (added after f32 accumulation).
    wq = w_head_major(params["wq"] * scale).astype(compute_dtype)
    wk = w_head_major(params["wk"]).astype(compute_dtype)
    wv = w_head_major(params["wv"]).astype(compute_dtype)
    bq = b_head_major(params["bq"] * scale).astype(jnp.float32)
    bk = b_head_major(params["bk"]).astype(jnp.float32)
    bv = b_head_major(params["bv"]).astype(jnp.float32)
    # ctx_concat @ Wo.T + bo == sum_h ctx_h @ Wo.T[h*d_k:(h+1)*d_k, :]
    wo = jnp.asarray(params["wo"]).T.reshape(num_heads, d_k, D).astype(compute_dtype)
    bo = jnp.asarray(params["bo"]).reshape(1, D).astype(jnp.float32)

    # TODO(synk): for very large D, split the resident projection weights along
    # the contraction dim with an extra grid axis, and single-buffer the
    # constant-index weight blocks (pl.Buffered(1)) for v7x's 64 MiB VMEM.

    # ---- Kernel 1: Q/K/V projection into head-major (B, H, S, d_k) ----
    proj_kernel = functools.partial(_qkv_proj_kernel, num_heads=num_heads,
                                    compute_dtype=compute_dtype)
    hm_shape = jax.ShapeDtypeStruct((B, num_heads, S, d_k), compute_dtype)
    q_hm, k_hm, v_hm = pl.pallas_call(
        proj_kernel,
        out_shape=(hm_shape, hm_shape, hm_shape),
        grid_spec=pltpu.PrefetchScalarGridSpec(
            num_scalar_prefetch=0,
            grid=(B, S // tp),
            in_specs=[
                pl.BlockSpec((1, tp, D), lambda b, si: (b, si, 0)),            # query
                pl.BlockSpec((1, tp, D), lambda b, si: (b, si, 0)),            # key
                pl.BlockSpec((1, tp, D), lambda b, si: (b, si, 0)),            # value
                pl.BlockSpec((num_heads, D, d_k), lambda b, si: (0, 0, 0)),    # Wq
                pl.BlockSpec((num_heads, D, d_k), lambda b, si: (0, 0, 0)),    # Wk
                pl.BlockSpec((num_heads, D, d_k), lambda b, si: (0, 0, 0)),    # Wv
                pl.BlockSpec((num_heads, 1, d_k), lambda b, si: (0, 0, 0)),    # bq
                pl.BlockSpec((num_heads, 1, d_k), lambda b, si: (0, 0, 0)),    # bk
                pl.BlockSpec((num_heads, 1, d_k), lambda b, si: (0, 0, 0)),    # bv
            ],
            out_specs=[
                pl.BlockSpec((1, num_heads, tp, d_k), lambda b, si: (b, 0, si, 0)),
                pl.BlockSpec((1, num_heads, tp, d_k), lambda b, si: (b, 0, si, 0)),
                pl.BlockSpec((1, num_heads, tp, d_k), lambda b, si: (b, 0, si, 0)),
            ],
        ),
        compiler_params=pltpu.CompilerParams(
            dimension_semantics=("parallel", "parallel"),
            vmem_limit_bytes=vmem_limit,
        ),
    )(query, key, value, wq, wk, wv, bq, bk, bv)

    # ---- Kernel 2: flash attention + fused output projection ----
    flash_kernel = functools.partial(_mhsa_flash_kernel, num_heads=num_heads,
                                     d_model=D, block_q=tq,
                                     compute_dtype=compute_dtype)
    return pl.pallas_call(
        flash_kernel,
        out_shape=jax.ShapeDtypeStruct((B, S, D), query.dtype),
        grid_spec=pltpu.PrefetchScalarGridSpec(
            num_scalar_prefetch=0,
            grid=(B, S // tq, S // tk),
            in_specs=[
                pl.BlockSpec((1, num_heads, tq, d_k),
                             lambda b, qi, ki: (b, 0, qi, 0)),                 # Q
                pl.BlockSpec((1, num_heads, tk, d_k),
                             lambda b, qi, ki: (b, 0, ki, 0)),                 # K
                pl.BlockSpec((1, num_heads, tk, d_k),
                             lambda b, qi, ki: (b, 0, ki, 0)),                 # V
                pl.BlockSpec((num_heads, d_k, D), lambda b, qi, ki: (0, 0, 0)),  # Wo
                pl.BlockSpec((1, D),              lambda b, qi, ki: (0, 0)),     # bo
            ],
            out_specs=pl.BlockSpec((1, tq, D), lambda b, qi, ki: (b, qi, 0)),
            scratch_shapes=[
                pltpu.VMEM((num_heads, tq, 1), jnp.float32),     # running max
                pltpu.VMEM((num_heads, tq, 1), jnp.float32),     # running sum
                pltpu.VMEM((num_heads, tq, d_k), jnp.float32),   # output accumulator
            ],
        ),
        compiler_params=pltpu.CompilerParams(
            # v7x megacore: B * (S // tq) is the parallel extent sharded across
            # the 2 TensorCores -- keep it >= 2 (pick tq accordingly when B=1).
            dimension_semantics=("parallel", "parallel", "arbitrary"),
            vmem_limit_bytes=vmem_limit,
        ),
    )(q_hm, k_hm, v_hm, wo, bo)


# --------------------------------------------------------------------------
# Pure-JAX reference (intended semantics) for verification
# --------------------------------------------------------------------------
def _reference(query, key, value, params, *, num_heads: int):
    B, S, D = query.shape
    d_k = D // num_heads

    def lin(x, w, b):
        return x @ w.T + b

    def split_heads(x):
        return x.reshape(B, S, num_heads, d_k).transpose(0, 2, 1, 3)

    q = split_heads(lin(query, params["wq"], params["bq"]))
    k = split_heads(lin(key,   params["wk"], params["bk"]))
    v = split_heads(lin(value, params["wv"], params["bv"]))

    scores = jnp.einsum("bhqd,bhkd->bhqk", q, k) / math.sqrt(d_k)
    p = jax.nn.softmax(scores, axis=-1)
    ctx = jnp.einsum("bhqk,bhkd->bhqd", p, v)
    ctx = ctx.transpose(0, 2, 1, 3).reshape(B, S, D)
    return lin(ctx, params["wo"], params["bo"])


# --------------------------------------------------------------------------
# Main
# --------------------------------------------------------------------------
if __name__ == "__main__":
    B, S, D, H = 2, 16, 32, 4  # batch, seq, d_model, num_heads
    TQ = TK = 8                # exercise the multi-tile online-softmax path

    key0 = jax.random.PRNGKey(0)
    ks = jax.random.split(key0, 12)

    bound = 1.0 / math.sqrt(D)  # PyTorch nn.Linear default init range

    def u(k, shape):
        return jax.random.uniform(k, shape, jnp.float32, -bound, bound)

    params = {
        "wq": u(ks[0], (D, D)), "bq": u(ks[1], (1, D)),
        "wk": u(ks[2], (D, D)), "bk": u(ks[3], (1, D)),
        "wv": u(ks[4], (D, D)), "bv": u(ks[5], (1, D)),
        "wo": u(ks[6], (D, D)), "bo": u(ks[7], (1, D)),
    }

    query = jax.random.normal(ks[8],  (B, S, D), jnp.float32)
    key_  = jax.random.normal(ks[9],  (B, S, D), jnp.float32)
    value = jax.random.normal(ks[10], (B, S, D), jnp.float32)

    ref = _reference(query, key_, value, params, num_heads=H)

    # f32-operand path: tight check (exact reciprocal, f32 accumulation).
    out_f32 = multihead_self_attention(query, key_, value, params, num_heads=H,
                                       block_q=TQ, block_k=TK,
                                       compute_dtype=jnp.float32)
    out_f32 = jax.block_until_ready(out_f32)
    assert out_f32.shape == (B, S, D)
    assert jnp.allclose(out_f32, ref, atol=1e-3, rtol=1e-3), "f32 mismatch vs reference"

    # Default bf16 MXU-operand path (f32 accumulation): looser tolerance due to
    # bf16 operand rounding in the projections / PV / output matmuls.
    out_bf16 = multihead_self_attention(query, key_, value, params, num_heads=H,
                                        block_q=TQ, block_k=TK)
    out_bf16 = jax.block_until_ready(out_bf16)
    assert out_bf16.shape == (B, S, D)
    assert jnp.allclose(out_bf16, ref, atol=5e-2, rtol=5e-2), "bf16 mismatch vs reference"

    print("KERNEL_OK")
</pallas_src>

<mosaic_0001>
module attributes {stable_mosaic.version = 11 : i64} {
  func.func @_qkv_proj_kernel(%arg0: i32, %arg1: i32, %arg2: memref<1x8x32xf32, #tpu.memory_space<vmem>>, %arg3: memref<1x8x32xf32, #tpu.memory_space<vmem>>, %arg4: memref<1x8x32xf32, #tpu.memory_space<vmem>>, %arg5: memref<4x32x8xf32, #tpu.memory_space<vmem>>, %arg6: memref<4x32x8xf32, #tpu.memory_space<vmem>>, %arg7: memref<4x32x8xf32, #tpu.memory_space<vmem>>, %arg8: memref<4x1x8xf32, #tpu.memory_space<vmem>>, %arg9: memref<4x1x8xf32, #tpu.memory_space<vmem>>, %arg10: memref<4x1x8xf32, #tpu.memory_space<vmem>>, %arg11: memref<1x4x8x8xf32, #tpu.memory_space<vmem>>, %arg12: memref<1x4x8x8xf32, #tpu.memory_space<vmem>>, %arg13: memref<1x4x8x8xf32, #tpu.memory_space<vmem>>) attributes {dimension_semantics = [#tpu.dimension_semantics<parallel>, #tpu.dimension_semantics<parallel>], iteration_bounds = array<i64: 2, 2>, scalar_prefetch = 0 : i64, scratch_operands = 0 : i64, tpu.core_type = #tpu.core_type<tc>, window_params = [{transform_indices = @transform_0, window_bounds = array<i64: 1, 8, 32>}, {transform_indices = @transform_1, window_bounds = array<i64: 1, 8, 32>}, {transform_indices = @transform_2, window_bounds = array<i64: 1, 8, 32>}, {pipeline_mode = #tpu.pipeline_mode<synchronous>, transform_indices = @transform_3, window_bounds = array<i64: 4, 32, 8>}, {pipeline_mode = #tpu.pipeline_mode<synchronous>, transform_indices = @transform_4, window_bounds = array<i64: 4, 32, 8>}, {pipeline_mode = #tpu.pipeline_mode<synchronous>, transform_indices = @transform_5, window_bounds = array<i64: 4, 32, 8>}, {pipeline_mode = #tpu.pipeline_mode<synchronous>, transform_indices = @transform_6, window_bounds = array<i64: 4, 1, 8>}, {pipeline_mode = #tpu.pipeline_mode<synchronous>, transform_indices = @transform_7, window_bounds = array<i64: 4, 1, 8>}, {pipeline_mode = #tpu.pipeline_mode<synchronous>, transform_indices = @transform_8, window_bounds = array<i64: 4, 1, 8>}, {transform_indices = @transform_9, window_bounds = array<i64: 1, 4, 8, 8>}, {transform_indices = @transform_10, window_bounds = array<i64: 1, 4, 8, 8>}, {transform_indices = @transform_11, window_bounds = array<i64: 1, 4, 8, 8>}]} {
    %c0 = arith.constant 0 : index
    %c0_0 = arith.constant 0 : index
    %c0_1 = arith.constant 0 : index
    %0 = vector.load %arg2[%c0, %c0_0, %c0_1] : memref<1x8x32xf32, #tpu.memory_space<vmem>>, vector<1x8x32xf32>
    %1 = vector.shape_cast %0 : vector<1x8x32xf32> to vector<8x32xf32>
    %c0_2 = arith.constant 0 : index
    %c0_3 = arith.constant 0 : index
    %c0_4 = arith.constant 0 : index
    %2 = vector.load %arg3[%c0_2, %c0_3, %c0_4] : memref<1x8x32xf32, #tpu.memory_space<vmem>>, vector<1x8x32xf32>
    %3 = vector.shape_cast %2 : vector<1x8x32xf32> to vector<8x32xf32>
    %c0_5 = arith.constant 0 : index
    %c0_6 = arith.constant 0 : index
    %c0_7 = arith.constant 0 : index
    %4 = vector.load %arg4[%c0_5, %c0_6, %c0_7] : memref<1x8x32xf32, #tpu.memory_space<vmem>>, vector<1x8x32xf32>
    %5 = vector.shape_cast %4 : vector<1x8x32xf32> to vector<8x32xf32>
    %c0_8 = arith.constant 0 : index
    %c0_9 = arith.constant 0 : index
    %c0_10 = arith.constant 0 : index
    %6 = vector.load %arg5[%c0_8, %c0_9, %c0_10] : memref<4x32x8xf32, #tpu.memory_space<vmem>>, vector<1x32x8xf32>
    %7 = vector.shape_cast %6 : vector<1x32x8xf32> to vector<32x8xf32>
    %cst = arith.constant dense<0.000000e+00> : vector<8x8xf32>
    %8 = tpu.matmul %1, %7, %cst {dimension_numbers = #tpu.dot_dimension_numbers<[1], [0], [0], [1], [0, 0, 1, 1], [], []>} : vector<8x32xf32>, vector<32x8xf32>, vector<8x8xf32> -> vector<8x8xf32>
    %c0_11 = arith.constant 0 : index
    %c0_12 = arith.constant 0 : index
    %c0_13 = arith.constant 0 : index
    %9 = vector.load %arg8[%c0_11, %c0_12, %c0_13] : memref<4x1x8xf32, #tpu.memory_space<vmem>>, vector<1x1x8xf32>
    %10 = vector.shape_cast %9 : vector<1x1x8xf32> to vector<1x8xf32>
    %11 = vector.broadcast %10 : vector<1x8xf32> to vector<8x8xf32>
    %12 = arith.addf %8, %11 : vector<8x8xf32>
    %c0_14 = arith.constant 0 : index
    %c0_15 = arith.constant 0 : index
    %c0_16 = arith.constant 0 : index
    %c0_17 = arith.constant 0 : index
    %13 = vector.load %arg11[%c0_14, %c0_15, %c0_16, %c0_17] : memref<1x4x8x8xf32, #tpu.memory_space<vmem>>, vector<1x1x8x8xf32>
    %14 = vector.shape_cast %13 : vector<1x1x8x8xf32> to vector<8x8xf32>
    %15 = vector.shape_cast %12 : vector<8x8xf32> to vector<1x1x8x8xf32>
    tpu.vector_store %arg11[%c0_14, %c0_15, %c0_16, %c0_17], %15 {strides = array<i32>} : memref<1x4x8x8xf32, #tpu.memory_space<vmem>>, vector<1x1x8x8xf32>,
    %c0_18 = arith.constant 0 : index
    %c0_19 = arith.constant 0 : index
    %c0_20 = arith.constant 0 : index
    %16 = vector.load %arg6[%c0_18, %c0_19, %c0_20] : memref<4x32x8xf32, #tpu.memory_space<vmem>>, vector<1x32x8xf32>
    %17 = vector.shape_cast %16 : vector<1x32x8xf32> to vector<32x8xf32>
    %cst_21 = arith.constant dense<0.000000e+00> : vector<8x8xf32>
    %18 = tpu.matmul %3, %17, %cst_21 {dimension_numbers = #tpu.dot_dimension_numbers<[1], [0], [0], [1], [0, 0, 1, 1], [], []>} : vector<8x32xf32>, vector<32x8xf32>, vector<8x8xf32> -> vector<8x8xf32>
    %c0_22 = arith.constant 0 : index
    %c0_23 = arith.constant 0 : index
    %c0_24 = arith.constant 0 : index
    %19 = vector.load %arg9[%c0_22, %c0_23, %c0_24] : memref<4x1x8xf32, #tpu.memory_space<vmem>>, vector<1x1x8xf32>
    %20 = vector.shape_cast %19 : vector<1x1x8xf32> to vector<1x8xf32>
    %21 = vector.broadcast %20 : vector<1x8xf32> to vector<8x8xf32>
    %22 = arith.addf %18, %21 : vector<8x8xf32>
    %c0_25 = arith.constant 0 : index
    %c0_26 = arith.constant 0 : index
    %c0_27 = arith.constant 0 : index
    %c0_28 = arith.constant 0 : index
    %23 = vector.load %arg12[%c0_25, %c0_26, %c0_27, %c0_28] : memref<1x4x8x8xf32, #tpu.memory_space<vmem>>, vector<1x1x8x8xf32>
    %24 = vector.shape_cast %23 : vector<1x1x8x8xf32> to vector<8x8xf32>
    %25 = vector.shape_cast %22 : vector<8x8xf32> to vector<1x1x8x8xf32>
    tpu.vector_store %arg12[%c0_25, %c0_26, %c0_27, %c0_28], %25 {strides = array<i32>} : memref<1x4x8x8xf32, #tpu.memory_space<vmem>>, vector<1x1x8x8xf32>,
    %c0_29 = arith.constant 0 : index
    %c0_30 = arith.constant 0 : index
    %c0_31 = arith.constant 0 : index
    %26 = vector.load %arg7[%c0_29, %c0_30, %c0_31] : memref<4x32x8xf32, #tpu.memory_space<vmem>>, vector<1x32x8xf32>
    %27 = vector.shape_cast %26 : vector<1x32x8xf32> to vector<32x8xf32>
    %cst_32 = arith.constant dense<0.000000e+00> : vector<8x8xf32>
    %28 = tpu.matmul %5, %27, %cst_32 {dimension_numbers = #tpu.dot_dimension_numbers<[1], [0], [0], [1], [0, 0, 1, 1], [], []>} : vector<8x32xf32>, vector<32x8xf32>, vector<8x8xf32> -> vector<8x8xf32>
    %c0_33 = arith.constant 0 : index
    %c0_34 = arith.constant 0 : index
    %c0_35 = arith.constant 0 : index
    %29 = vector.load %arg10[%c0_33, %c0_34, %c0_35] : memref<4x1x8xf32, #tpu.memory_space<vmem>>, vector<1x1x8xf32>
    %30 = vector.shape_cast %29 : vector<1x1x8xf32> to vector<1x8xf32>
    %31 = vector.broadcast %30 : vector<1x8xf32> to vector<8x8xf32>
    %32 = arith.addf %28, %31 : vector<8x8xf32>
    %c0_36 = arith.constant 0 : index
    %c0_37 = arith.constant 0 : index
    %c0_38 = arith.constant 0 : index
    %c0_39 = arith.constant 0 : index
    %33 = vector.load %arg13[%c0_36, %c0_37, %c0_38, %c0_39] : memref<1x4x8x8xf32, #tpu.memory_space<vmem>>, vector<1x1x8x8xf32>
    %34 = vector.shape_cast %33 : vector<1x1x8x8xf32> to vector<8x8xf32>
    %35 = vector.shape_cast %32 : vector<8x8xf32> to vector<1x1x8x8xf32>
    tpu.vector_store %arg13[%c0_36, %c0_37, %c0_38, %c0_39], %35 {strides = array<i32>} : memref<1x4x8x8xf32, #tpu.memory_space<vmem>>, vector<1x1x8x8xf32>,
    %c1 = arith.constant 1 : index
    %c0_40 = arith.constant 0 : index
    %c0_41 = arith.constant 0 : index
    %36 = vector.load %arg5[%c1, %c0_40, %c0_41] : memref<4x32x8xf32, #tpu.memory_space<vmem>>, vector<1x32x8xf32>
    %37 = vector.shape_cast %36 : vector<1x32x8xf32> to vector<32x8xf32>
    %cst_42 = arith.constant dense<0.000000e+00> : vector<8x8xf32>
    %38 = tpu.matmul %1, %37, %cst_42 {dimension_numbers = #tpu.dot_dimension_numbers<[1], [0], [0], [1], [0, 0, 1, 1], [], []>} : vector<8x32xf32>, vector<32x8xf32>, vector<8x8xf32> -> vector<8x8xf32>
    %c1_43 = arith.constant 1 : index
    %c0_44 = arith.constant 0 : index
    %c0_45 = arith.constant 0 : index
    %39 = vector.load %arg8[%c1_43, %c0_44, %c0_45] : memref<4x1x8xf32, #tpu.memory_space<vmem>>, vector<1x1x8xf32>
    %40 = vector.shape_cast %39 : vector<1x1x8xf32> to vector<1x8xf32>
    %41 = vector.broadcast %40 : vector<1x8xf32> to vector<8x8xf32>
    %42 = arith.addf %38, %41 : vector<8x8xf32>
    %c0_46 = arith.constant 0 : index
    %c1_47 = arith.constant 1 : index
    %c0_48 = arith.constant 0 : index
    %c0_49 = arith.constant 0 : index
    %43 = vector.load %arg11[%c0_46, %c1_47, %c0_48, %c0_49] : memref<1x4x8x8xf32, #tpu.memory_space<vmem>>, vector<1x1x8x8xf32>
    %44 = vector.shape_cast %43 : vector<1x1x8x8xf32> to vector<8x8xf32>
    %45 = vector.shape_cast %42 : vector<8x8xf32> to vector<1x1x8x8xf32>
    tpu.vector_store %arg11[%c0_46, %c1_47, %c0_48, %c0_49], %45 {strides = array<i32>} : memref<1x4x8x8xf32, #tpu.memory_space<vmem>>, vector<1x1x8x8xf32>,
    %c1_50 = arith.constant 1 : index
    %c0_51 = arith.constant 0 : index
    %c0_52 = arith.constant 0 : index
    %46 = vector.load %arg6[%c1_50, %c0_51, %c0_52] : memref<4x32x8xf32, #tpu.memory_space<vmem>>, vector<1x32x8xf32>
    %47 = vector.shape_cast %46 : vector<1x32x8xf32> to vector<32x8xf32>
    %cst_53 = arith.constant dense<0.000000e+00> : vector<8x8xf32>
    %48 = tpu.matmul %3, %47, %cst_53 {dimension_numbers = #tpu.dot_dimension_numbers<[1], [0], [0], [1], [0, 0, 1, 1], [], []>} : vector<8x32xf32>, vector<32x8xf32>, vector<8x8xf32> -> vector<8x8xf32>
    %c1_54 = arith.constant 1 : index
    %c0_55 = arith.constant 0 : index
    %c0_56 = arith.constant 0 : index
    %49 = vector.load %arg9[%c1_54, %c0_55, %c0_56] : memref<4x1x8xf32, #tpu.memory_space<vmem>>, vector<1x1x8xf32>
    %50 = vector.shape_cast %49 : vector<1x1x8xf32> to vector<1x8xf32>
    %51 = vector.broadcast %50 : vector<1x8xf32> to vector<8x8xf32>
    %52 = arith.addf %48, %51 : vector<8x8xf32>
    %c0_57 = arith.constant 0 : index
    %c1_58 = arith.constant 1 : index
    %c0_59 = arith.constant 0 : index
    %c0_60 = arith.constant 0 : index
    %53 = vector.load %arg12[%c0_57, %c1_58, %c0_59, %c0_60] : memref<1x4x8x8xf32, #tpu.memory_space<vmem>>, vector<1x1x8x8xf32>
    %54 = vector.shape_cast %53 : vector<1x1x8x8xf32> to vector<8x8xf32>
    %55 = vector.shape_cast %52 : vector<8x8xf32> to vector<1x1x8x8xf32>
    tpu.vector_store %arg12[%c0_57, %c1_58, %c0_59, %c0_60], %55 {strides = array<i32>} : memref<1x4x8x8xf32, #tpu.memory_space<vmem>>, vector<1x1x8x8xf32>,
    %c1_61 = arith.constant 1 : index
    %c0_62 = arith.constant 0 : index
    %c0_63 = arith.constant 0 : index
    %56 = vector.load %arg7[%c1_61, %c0_62, %c0_63] : memref<4x32x8xf32, #tpu.memory_space<vmem>>, vector<1x32x8xf32>
    %57 = vector.shape_cast %56 : vector<1x32x8xf32> to vector<32x8xf32>
    %cst_64 = arith.constant dense<0.000000e+00> : vector<8x8xf32>
    %58 = tpu.matmul %5, %57, %cst_64 {dimension_numbers = #tpu.dot_dimension_numbers<[1], [0], [0], [1], [0, 0, 1, 1], [], []>} : vector<8x32xf32>, vector<32x8xf32>, vector<8x8xf32> -> vector<8x8xf32>
    %c1_65 = arith.constant 1 : index
    %c0_66 = arith.constant 0 : index
    %c0_67 = arith.constant 0 : index
    %59 = vector.load %arg10[%c1_65, %c0_66, %c0_67] : memref<4x1x8xf32, #tpu.memory_space<vmem>>, vector<1x1x8xf32>
    %60 = vector.shape_cast %59 : vector<1x1x8xf32> to vector<1x8xf32>
    %61 = vector.broadcast %60 : vector<1x8xf32> to vector<8x8xf32>
    %62 = arith.addf %58, %61 : vector<8x8xf32>
    %c0_68 = arith.constant 0 : index
    %c1_69 = arith.constant 1 : index
    %c0_70 = arith.constant 0 : index
    %c0_71 = arith.constant 0 : index
    %63 = vector.load %arg13[%c0_68, %c1_69, %c0_70, %c0_71] : memref<1x4x8x8xf32, #tpu.memory_space<vmem>>, vector<1x1x8x8xf32>
    %64 = vector.shape_cast %63 : vector<1x1x8x8xf32> to vector<8x8xf32>
    %65 = vector.shape_cast %62 : vector<8x8xf32> to vector<1x1x8x8xf32>
    tpu.vector_store %arg13[%c0_68, %c1_69, %c0_70, %c0_71], %65 {strides = array<i32>} : memref<1x4x8x8xf32, #tpu.memory_space<vmem>>, vector<1x1x8x8xf32>,
    %c2 = arith.constant 2 : index
    %c0_72 = arith.constant 0 : index
    %c0_73 = arith.constant 0 : index
    %66 = vector.load %arg5[%c2, %c0_72, %c0_73] : memref<4x32x8xf32, #tpu.memory_space<vmem>>, vector<1x32x8xf32>
    %67 = vector.shape_cast %66 : vector<1x32x8xf32> to vector<32x8xf32>
    %cst_74 = arith.constant dense<0.000000e+00> : vector<8x8xf32>
    %68 = tpu.matmul %1, %67, %cst_74 {dimension_numbers = #tpu.dot_dimension_numbers<[1], [0], [0], [1], [0, 0, 1, 1], [], []>} : vector<8x32xf32>, vector<32x8xf32>, vector<8x8xf32> -> vector<8x8xf32>
    %c2_75 = arith.constant 2 : index
    %c0_76 = arith.constant 0 : index
    %c0_77 = arith.constant 0 : index
    %69 = vector.load %arg8[%c2_75, %c0_76, %c0_77] : memref<4x1x8xf32, #tpu.memory_space<vmem>>, vector<1x1x8xf32>
    %70 = vector.shape_cast %69 : vector<1x1x8xf32> to vector<1x8xf32>
    %71 = vector.broadcast %70 : vector<1x8xf32> to vector<8x8xf32>
    %72 = arith.addf %68, %71 : vector<8x8xf32>
    %c0_78 = arith.constant 0 : index
    %c2_79 = arith.constant 2 : index
    %c0_80 = arith.constant 0 : index
    %c0_81 = arith.constant 0 : index
    %73 = vector.load %arg11[%c0_78, %c2_79, %c0_80, %c0_81] : memref<1x4x8x8xf32, #tpu.memory_space<vmem>>, vector<1x1x8x8xf32>
    %74 = vector.shape_cast %73 : vector<1x1x8x8xf32> to vector<8x8xf32>
    %75 = vector.shape_cast %72 : vector<8x8xf32> to vector<1x1x8x8xf32>
    tpu.vector_store %arg11[%c0_78, %c2_79, %c0_80, %c0_81], %75 {strides = array<i32>} : memref<1x4x8x8xf32, #tpu.memory_space<vmem>>, vector<1x1x8x8xf32>,
    %c2_82 = arith.constant 2 : index
    %c0_83 = arith.constant 0 : index
    %c0_84 = arith.constant 0 : index
    %76 = vector.load %arg6[%c2_82, %c0_83, %c0_84] : memref<4x32x8xf32, #tpu.memory_space<vmem>>, vector<1x32x8xf32>
    %77 = vector.shape_cast %76 : vector<1x32x8xf32> to vector<32x8xf32>
    %cst_85 = arith.constant dense<0.000000e+00> : vector<8x8xf32>
    %78 = tpu.matmul %3, %77, %cst_85 {dimension_numbers = #tpu.dot_dimension_numbers<[1], [0], [0], [1], [0, 0, 1, 1], [], []>} : vector<8x32xf32>, vector<32x8xf32>, vector<8x8xf32> -> vector<8x8xf32>
    %c2_86 = arith.constant 2 : index
    %c0_87 = arith.constant 0 : index
    %c0_88 = arith.constant 0 : index
    %79 = vector.load %arg9[%c2_86, %c0_87, %c0_88] : memref<4x1x8xf32, #tpu.memory_space<vmem>>, vector<1x1x8xf32>
    %80 = vector.shape_cast %79 : vector<1x1x8xf32> to vector<1x8xf32>
    %81 = vector.broadcast %80 : vector<1x8xf32> to vector<8x8xf32>
    %82 = arith.addf %78, %81 : vector<8x8xf32>
    %c0_89 = arith.constant 0 : index
    %c2_90 = arith.constant 2 : index
    %c0_91 = arith.constant 0 : index
    %c0_92 = arith.constant 0 : index
    %83 = vector.load %arg12[%c0_89, %c2_90, %c0_91, %c0_92] : memref<1x4x8x8xf32, #tpu.memory_space<vmem>>, vector<1x1x8x8xf32>
    %84 = vector.shape_cast %83 : vector<1x1x8x8xf32> to vector<8x8xf32>
    %85 = vector.shape_cast %82 : vector<8x8xf32> to vector<1x1x8x8xf32>
    tpu.vector_store %arg12[%c0_89, %c2_90, %c0_91, %c0_92], %85 {strides = array<i32>} : memref<1x4x8x8xf32, #tpu.memory_space<vmem>>, vector<1x1x8x8xf32>,
    %c2_93 = arith.constant 2 : index
    %c0_94 = arith.constant 0 : index
    %c0_95 = arith.constant 0 : index
    %86 = vector.load %arg7[%c2_93, %c0_94, %c0_95] : memref<4x32x8xf32, #tpu.memory_space<vmem>>, vector<1x32x8xf32>
    %87 = vector.shape_cast %86 : vector<1x32x8xf32> to vector<32x8xf32>
    %cst_96 = arith.constant dense<0.000000e+00> : vector<8x8xf32>
    %88 = tpu.matmul %5, %87, %cst_96 {dimension_numbers = #tpu.dot_dimension_numbers<[1], [0], [0], [1], [0, 0, 1, 1], [], []>} : vector<8x32xf32>, vector<32x8xf32>, vector<8x8xf32> -> vector<8x8xf32>
    %c2_97 = arith.constant 2 : index
    %c0_98 = arith.constant 0 : index
    %c0_99 = arith.constant 0 : index
    %89 = vector.load %arg10[%c2_97, %c0_98, %c0_99] : memref<4x1x8xf32, #tpu.memory_space<vmem>>, vector<1x1x8xf32>
    %90 = vector.shape_cast %89 : vector<1x1x8xf32> to vector<1x8xf32>
    %91 = vector.broadcast %90 : vector<1x8xf32> to vector<8x8xf32>
    %92 = arith.addf %88, %91 : vector<8x8xf32>
    %c0_100 = arith.constant 0 : index
    %c2_101 = arith.constant 2 : index
    %c0_102 = arith.constant 0 : index
    %c0_103 = arith.constant 0 : index
    %93 = vector.load %arg13[%c0_100, %c2_101, %c0_102, %c0_103] : memref<1x4x8x8xf32, #tpu.memory_space<vmem>>, vector<1x1x8x8xf32>
    %94 = vector.shape_cast %93 : vector<1x1x8x8xf32> to vector<8x8xf32>
    %95 = vector.shape_cast %92 : vector<8x8xf32> to vector<1x1x8x8xf32>
    tpu.vector_store %arg13[%c0_100, %c2_101, %c0_102, %c0_103], %95 {strides = array<i32>} : memref<1x4x8x8xf32, #tpu.memory_space<vmem>>, vector<1x1x8x8xf32>,
    %c3 = arith.constant 3 : index
    %c0_104 = arith.constant 0 : index
    %c0_105 = arith.constant 0 : index
    %96 = vector.load %arg5[%c3, %c0_104, %c0_105] : memref<4x32x8xf32, #tpu.memory_space<vmem>>, vector<1x32x8xf32>
    %97 = vector.shape_cast %96 : vector<1x32x8xf32> to vector<32x8xf32>
    %cst_106 = arith.constant dense<0.000000e+00> : vector<8x8xf32>
    %98 = tpu.matmul %1, %97, %cst_106 {dimension_numbers = #tpu.dot_dimension_numbers<[1], [0], [0], [1], [0, 0, 1, 1], [], []>} : vector<8x32xf32>, vector<32x8xf32>, vector<8x8xf32> -> vector<8x8xf32>
    %c3_107 = arith.constant 3 : index
    %c0_108 = arith.constant 0 : index
    %c0_109 = arith.constant 0 : index
    %99 = vector.load %arg8[%c3_107, %c0_108, %c0_109] : memref<4x1x8xf32, #tpu.memory_space<vmem>>, vector<1x1x8xf32>
    %100 = vector.shape_cast %99 : vector<1x1x8xf32> to vector<1x8xf32>
    %101 = vector.broadcast %100 : vector<1x8xf32> to vector<8x8xf32>
    %102 = arith.addf %98, %101 : vector<8x8xf32>
    %c0_110 = arith.constant 0 : index
    %c3_111 = arith.constant 3 : index
    %c0_112 = arith.constant 0 : index
    %c0_113 = arith.constant 0 : index
    %103 = vector.load %arg11[%c0_110, %c3_111, %c0_112, %c0_113] : memref<1x4x8x8xf32, #tpu.memory_space<vmem>>, vector<1x1x8x8xf32>
    %104 = vector.shape_cast %103 : vector<1x1x8x8xf32> to vector<8x8xf32>
    %105 = vector.shape_cast %102 : vector<8x8xf32> to vector<1x1x8x8xf32>
    tpu.vector_store %arg11[%c0_110, %c3_111, %c0_112, %c0_113], %105 {strides = array<i32>} : memref<1x4x8x8xf32, #tpu.memory_space<vmem>>, vector<1x1x8x8xf32>,
    %c3_114 = arith.constant 3 : index
    %c0_115 = arith.constant 0 : index
    %c0_116 = arith.constant 0 : index
    %106 = vector.load %arg6[%c3_114, %c0_115, %c0_116] : memref<4x32x8xf32, #tpu.memory_space<vmem>>, vector<1x32x8xf32>
    %107 = vector.shape_cast %106 : vector<1x32x8xf32> to vector<32x8xf32>
    %cst_117 = arith.constant dense<0.000000e+00> : vector<8x8xf32>
    %108 = tpu.matmul %3, %107, %cst_117 {dimension_numbers = #tpu.dot_dimension_numbers<[1], [0], [0], [1], [0, 0, 1, 1], [], []>} : vector<8x32xf32>, vector<32x8xf32>, vector<8x8xf32> -> vector<8x8xf32>
    %c3_118 = arith.constant 3 : index
    %c0_119 = arith.constant 0 : index
    %c0_120 = arith.constant 0 : index
    %109 = vector.load %arg9[%c3_118, %c0_119, %c0_120] : memref<4x1x8xf32, #tpu.memory_space<vmem>>, vector<1x1x8xf32>
    %110 = vector.shape_cast %109 : vector<1x1x8xf32> to vector<1x8xf32>
    %111 = vector.broadcast %110 : vector<1x8xf32> to vector<8x8xf32>
    %112 = arith.addf %108, %111 : vector<8x8xf32>
    %c0_121 = arith.constant 0 : index
    %c3_122 = arith.constant 3 : index
    %c0_123 = arith.constant 0 : index
    %c0_124 = arith.constant 0 : index
    %113 = vector.load %arg12[%c0_121, %c3_122, %c0_123, %c0_124] : memref<1x4x8x8xf32, #tpu.memory_space<vmem>>, vector<1x1x8x8xf32>
    %114 = vector.shape_cast %113 : vector<1x1x8x8xf32> to vector<8x8xf32>
    %115 = vector.shape_cast %112 : vector<8x8xf32> to vector<1x1x8x8xf32>
    tpu.vector_store %arg12[%c0_121, %c3_122, %c0_123, %c0_124], %115 {strides = array<i32>} : memref<1x4x8x8xf32, #tpu.memory_space<vmem>>, vector<1x1x8x8xf32>,
    %c3_125 = arith.constant 3 : index
    %c0_126 = arith.constant 0 : index
    %c0_127 = arith.constant 0 : index
    %116 = vector.load %arg7[%c3_125, %c0_126, %c0_127] : memref<4x32x8xf32, #tpu.memory_space<vmem>>, vector<1x32x8xf32>
    %117 = vector.shape_cast %116 : vector<1x32x8xf32> to vector<32x8xf32>
    %cst_128 = arith.constant dense<0.000000e+00> : vector<8x8xf32>
    %118 = tpu.matmul %5, %117, %cst_128 {dimension_numbers = #tpu.dot_dimension_numbers<[1], [0], [0], [1], [0, 0, 1, 1], [], []>} : vector<8x32xf32>, vector<32x8xf32>, vector<8x8xf32> -> vector<8x8xf32>
    %c3_129 = arith.constant 3 : index
    %c0_130 = arith.constant 0 : index
    %c0_131 = arith.constant 0 : index
    %119 = vector.load %arg10[%c3_129, %c0_130, %c0_131] : memref<4x1x8xf32, #tpu.memory_space<vmem>>, vector<1x1x8xf32>
    %120 = vector.shape_cast %119 : vector<1x1x8xf32> to vector<1x8xf32>
    %121 = vector.broadcast %120 : vector<1x8xf32> to vector<8x8xf32>
    %122 = arith.addf %118, %121 : vector<8x8xf32>
    %c0_132 = arith.constant 0 : index
    %c3_133 = arith.constant 3 : index
    %c0_134 = arith.constant 0 : index
    %c0_135 = arith.constant 0 : index
    %123 = vector.load %arg13[%c0_132, %c3_133, %c0_134, %c0_135] : memref<1x4x8x8xf32, #tpu.memory_space<vmem>>, vector<1x1x8x8xf32>
    %124 = vector.shape_cast %123 : vector<1x1x8x8xf32> to vector<8x8xf32>
    %125 = vector.shape_cast %122 : vector<8x8xf32> to vector<1x1x8x8xf32>
    tpu.vector_store %arg13[%c0_132, %c3_133, %c0_134, %c0_135], %125 {strides = array<i32>} : memref<1x4x8x8xf32, #tpu.memory_space<vmem>>, vector<1x1x8x8xf32>,
    return
  }
  func.func @transform_0(%arg0: i32, %arg1: i32) -> (i32, i32, i32) {
    %c0_i32 = arith.constant 0 : i32
    %c0_i32_0 = arith.constant 0 : i32
    return %arg0, %arg1, %c0_i32 : i32, i32, i32
  }
  func.func @transform_1(%arg0: i32, %arg1: i32) -> (i32, i32, i32) {
    %c0_i32 = arith.constant 0 : i32
    %c0_i32_0 = arith.constant 0 : i32
    return %arg0, %arg1, %c0_i32 : i32, i32, i32
  }
  func.func @transform_2(%arg0: i32, %arg1: i32) -> (i32, i32, i32) {
    %c0_i32 = arith.constant 0 : i32
    %c0_i32_0 = arith.constant 0 : i32
    return %arg0, %arg1, %c0_i32 : i32, i32, i32
  }
  func.func @transform_3(%arg0: i32, %arg1: i32) -> (i32, i32, i32) {
    %c0_i32 = arith.constant 0 : i32
    %c0_i32_0 = arith.constant 0 : i32
    %c0_i32_1 = arith.constant 0 : i32
    %c0_i32_2 = arith.constant 0 : i32
    return %c0_i32, %c0_i32_0, %c0_i32_1 : i32, i32, i32
  }
  func.func @transform_4(%arg0: i32, %arg1: i32) -> (i32, i32, i32) {
    %c0_i32 = arith.constant 0 : i32
    %c0_i32_0 = arith.constant 0 : i32
    %c0_i32_1 = arith.constant 0 : i32
    %c0_i32_2 = arith.constant 0 : i32
    return %c0_i32, %c0_i32_0, %c0_i32_1 : i32, i32, i32
  }
  func.func @transform_5(%arg0: i32, %arg1: i32) -> (i32, i32, i32) {
    %c0_i32 = arith.constant 0 : i32
    %c0_i32_0 = arith.constant 0 : i32
    %c0_i32_1 = arith.constant 0 : i32
    %c0_i32_2 = arith.constant 0 : i32
    return %c0_i32, %c0_i32_0, %c0_i32_1 : i32, i32, i32
  }
  func.func @transform_6(%arg0: i32, %arg1: i32) -> (i32, i32, i32) {
    %c0_i32 = arith.constant 0 : i32
    %c0_i32_0 = arith.constant 0 : i32
    %c0_i32_1 = arith.constant 0 : i32
    %c0_i32_2 = arith.constant 0 : i32
    return %c0_i32, %c0_i32_0, %c0_i32_1 : i32, i32, i32
  }
  func.func @transform_7(%arg0: i32, %arg1: i32) -> (i32, i32, i32) {
    %c0_i32 = arith.constant 0 : i32
    %c0_i32_0 = arith.constant 0 : i32
    %c0_i32_1 = arith.constant 0 : i32
    %c0_i32_2 = arith.constant 0 : i32
    return %c0_i32, %c0_i32_0, %c0_i32_1 : i32, i32, i32
  }
  func.func @transform_8(%arg0: i32, %arg1: i32) -> (i32, i32, i32) {
    %c0_i32 = arith.constant 0 : i32
    %c0_i32_0 = arith.constant 0 : i32
    %c0_i32_1 = arith.constant 0 : i32
    %c0_i32_2 = arith.constant 0 : i32
    return %c0_i32, %c0_i32_0, %c0_i32_1 : i32, i32, i32
  }
  func.func @transform_9(%arg0: i32, %arg1: i32) -> (i32, i32, i32, i32) {
    %c0_i32 = arith.constant 0 : i32
    %c0_i32_0 = arith.constant 0 : i32
    %c0_i32_1 = arith.constant 0 : i32
    return %arg0, %c0_i32, %arg1, %c0_i32_0 : i32, i32, i32, i32
  }
  func.func @transform_10(%arg0: i32, %arg1: i32) -> (i32, i32, i32, i32) {
    %c0_i32 = arith.constant 0 : i32
    %c0_i32_0 = arith.constant 0 : i32
    %c0_i32_1 = arith.constant 0 : i32
    return %arg0, %c0_i32, %arg1, %c0_i32_0 : i32, i32, i32, i32
  }
  func.func @transform_11(%arg0: i32, %arg1: i32) -> (i32, i32, i32, i32) {
    %c0_i32 = arith.constant 0 : i32
    %c0_i32_0 = arith.constant 0 : i32
    %c0_i32_1 = arith.constant 0 : i32
    return %arg0, %c0_i32, %arg1, %c0_i32_0 : i32, i32, i32, i32
  }
}

</mosaic_0001>

<llo_original>
// kernel: tpu_custom_call.1
$region0: #{tpu_custom_call.1}
  #allocation0 [shape = 'u32[]', space=smem, size = 0x4, offset = 0x4, fixed_abs, tag = 'smem constant byte address 0x4 - core index']
  #allocation1 [shape = 'u32[144,128]{1,0:T(1,128)}', space=vmem, size = 0x12000, scoped, tag = 'internal scratch']
  %s0 = inlined_call_operand.vmem [shape: f32[2,16,32], index: 0, kind: input, shape index: {}]
  %s1 = inlined_call_operand.vmem [shape: f32[2,16,32], index: 1, kind: input, shape index: {}]
  %s2 = inlined_call_operand.vmem [shape: f32[2,16,32], index: 2, kind: input, shape index: {}]
  %s3 = inlined_call_operand.vmem [shape: f32[4,32,8], index: 3, kind: input, shape index: {}]
  %s4 = inlined_call_operand.vmem [shape: f32[4,32,8], index: 4, kind: input, shape index: {}]
  %s5 = inlined_call_operand.vmem [shape: f32[4,32,8], index: 5, kind: input, shape index: {}]
  %s6 = inlined_call_operand.vmem [shape: f32[4,1,8], index: 6, kind: input, shape index: {}]
  %s7 = inlined_call_operand.vmem [shape: f32[4,1,8], index: 7, kind: input, shape index: {}]
  %s8 = inlined_call_operand.vmem [shape: f32[4,1,8], index: 8, kind: input, shape index: {}]
  %s9 = inlined_call_operand.vmem [shape: f32[2,4,16,8], index: 9, kind: output, shape index: {0}]
  %s10 = inlined_call_operand.vmem [shape: f32[2,4,16,8], index: 10, kind: output, shape index: {1}]
  %s11 = inlined_call_operand.vmem [shape: f32[2,4,16,8], index: 11, kind: output, shape index: {2}]
  %12 = xla_tuple %s9, %s10, %s11
  %s13 = sld [smem:[#allocation0]]
  $region187: #{tpu_custom_call.1} parent=0
    _
  %s15 = ssub.s32 1, %s13
  %s16 = scalar_select 0, %s15, %s13
  $region1: #{tpu_custom_call.1} parent=0
    #allocation2 [shape = 'u8[32768]{0}', space=vmem, size = 0x8000, scoped, tag = 'output window, operand 0']
    #allocation3 [shape = 'u8[32768]{0}', space=vmem, size = 0x8000, scoped, tag = 'output window, operand 1']
    #allocation4 [shape = 'u8[32768]{0}', space=vmem, size = 0x8000, scoped, tag = 'output window, operand 2']
    loop: start=0, step=1, limit=6
    $region2: #{tpu_custom_call.1} parent=1 // loop_pre_header
      _
    $region3: #{tpu_custom_call.1} parent=1 // loop_header
      %s18 = sphi 0, %s22
      %p19 = scmp.ge.s32.totalorder %s18, 6
      %s25 = sphi 0, %s37
      %s26 = sphi 0, %s33
      %s27 = sphi 0, %s25
      %s28 = sphi 0, %s26
      %s29 = sphi 0, %s27
      %s30 = sphi 0, %s28
      %s42 = sphi 0, %s44
      %s45 = sphi 0, %s42
      %s46 = sphi 0, %s45
      %s62 = sphi 0, %s46
      %s70 = sphi 0, %s72
      %s73 = sphi 0, %s70
      %s74 = sphi 0, %s73
      %s90 = sphi 0, %s74
      %s98 = sphi 0, %s100
      %s101 = sphi 0, %s98
      %s102 = sphi 0, %s101
      %s118 = sphi 0, %s102
      %s122 = sphi 0, %s122
      %s124 = sphi 0, %s122
      %s125 = sphi 0, %s124
      %s139 = sphi 0, %s125
      %s143 = sphi 0, %s143
      %s145 = sphi 0, %s143
      %s146 = sphi 0, %s145
      %s160 = sphi 0, %s146
      %s164 = sphi 0, %s164
      %s166 = sphi 0, %s164
      %s167 = sphi 0, %s166
      %s181 = sphi 0, %s167
      %s185 = sphi 0, %s185
      %s187 = sphi 0, %s185
      %s188 = sphi 0, %s187
      %s202 = sphi 0, %s188
      %s206 = sphi 0, %s206
      %s208 = sphi 0, %s206
      %s209 = sphi 0, %s208
      %s223 = sphi 0, %s209
      %s227 = sphi 0, %s227
      %s229 = sphi 0, %s227
      %s230 = sphi 0, %s229
      %s244 = sphi 0, %s230
      %s252 = sphi 0, %s254
      %s255 = sphi 0, %s252
      %s256 = sphi 0, %s255
      %s272 = sphi 0, %s256
      %s280 = sphi 0, %s282
      %s283 = sphi 0, %s280
      %s284 = sphi 0, %s283
      %s300 = sphi 0, %s284
      %s308 = sphi 0, %s310
      %s311 = sphi 0, %s308
      %s312 = sphi 0, %s311
      %s328 = sphi 0, %s312
    $region4: #{tpu_custom_call.1} parent=1 // loop_header_branch
      %21 = sbr.rel (%p19) target = $region8
    $region5: #{tpu_custom_call.1} parent=1 // loop_body
      %s23 = ssub.s32 %s18, 1
      %s24 = ssub.s32 %s18, 2
      %s31 = sadd.s32 1, %s26
      %p32 = scmp.ge.s32.totalorder %s31, 2
      %s33 = scalar_select %p32, 0, %s31
      %s34 = sadd.s32 1, %s25
      %s35 = scalar_select %p32, %s34, %s25
      %p36 = scmp.ge.s32.totalorder %s35, 2
      %s37 = scalar_select %p36, 0, %s35
      %s38 = ssub.s32 %s25, %s37
      %s39 = ssub.s32 %s26, %s33
      %s40 = sor.u32 %s38, %s39
      %p41 = scmp.eq.s32.totalorder %s40, 0
      %s43 = sadd.s32 %s42, 1
      %s44 = scalar_select %p41, %s42, %s43
      %p47 = pneg %p41
      %p48 = scmp.eq.s32.totalorder %s18, 3
      %p49 = por %p47, %p48
      %p50 = scmp.ne.s32.totalorder %s42, %s45
      %p51 = scmp.eq.s32.totalorder %s18, 0
      %p52 = por %p50, %p51
      %p53 = scmp.ne.s32.totalorder %s42, %s45
      %p54 = scmp.eq.s32.totalorder %s23, 3
      %p55 = por %p53, %p54
      %p56 = scmp.ne.s32.totalorder %s45, %s46
      %p57 = scmp.eq.s32.totalorder %s23, 0
      %p58 = por %p56, %p57
      %p59 = scmp.ne.s32.totalorder %s45, %s46
      %p60 = scmp.eq.s32.totalorder %s24, 3
      %p61 = por %p59, %p60
      %p63 = scmp.ne.s32.totalorder %s46, %s62
      %p64 = scmp.eq.s32.totalorder %s24, 0
      %p65 = por %p63, %p64
      %s66 = ssub.s32 %s25, %s37
      %s67 = ssub.s32 %s26, %s33
      %s68 = sor.u32 %s66, %s67
      %p69 = scmp.eq.s32.totalorder %s68, 0
      %s71 = sadd.s32 %s70, 1
      %s72 = scalar_select %p69, %s70, %s71
      %p75 = pneg %p69
      %p76 = scmp.eq.s32.totalorder %s18, 3
      %p77 = por %p75, %p76
      %p78 = scmp.ne.s32.totalorder %s70, %s73
      %p79 = scmp.eq.s32.totalorder %s18, 0
      %p80 = por %p78, %p79
      %p81 = scmp.ne.s32.totalorder %s70, %s73
      %p82 = scmp.eq.s32.totalorder %s23, 3
      %p83 = por %p81, %p82
      %p84 = scmp.ne.s32.totalorder %s73, %s74
      %p85 = scmp.eq.s32.totalorder %s23, 0
      %p86 = por %p84, %p85
      %p87 = scmp.ne.s32.totalorder %s73, %s74
      %p88 = scmp.eq.s32.totalorder %s24, 3
      %p89 = por %p87, %p88
      %p91 = scmp.ne.s32.totalorder %s74, %s90
      %p92 = scmp.eq.s32.totalorder %s24, 0
      %p93 = por %p91, %p92
      %s94 = ssub.s32 %s25, %s37
      %s95 = ssub.s32 %s26, %s33
      %s96 = sor.u32 %s94, %s95
      %p97 = scmp.eq.s32.totalorder %s96, 0
      %s99 = sadd.s32 %s98, 1
      %s100 = scalar_select %p97, %s98, %s99
      %p103 = pneg %p97
      %p104 = scmp.eq.s32.totalorder %s18, 3
      %p105 = por %p103, %p104
      %p106 = scmp.ne.s32.totalorder %s98, %s101
      %p107 = scmp.eq.s32.totalorder %s18, 0
      %p108 = por %p106, %p107
      %p109 = scmp.ne.s32.totalorder %s98, %s101
      %p110 = scmp.eq.s32.totalorder %s23, 3
      %p111 = por %p109, %p110
      %p112 = scmp.ne.s32.totalorder %s101, %s102
      %p113 = scmp.eq.s32.totalorder %s23, 0
      %p114 = por %p112, %p113
      %p115 = scmp.ne.s32.totalorder %s101, %s102
      %p116 = scmp.eq.s32.totalorder %s24, 3
      %p117 = por %p115, %p116
      %p119 = scmp.ne.s32.totalorder %s102, %s118
      %p120 = scmp.eq.s32.totalorder %s24, 0
      %p121 = por %p119, %p120
      %s123 = sadd.s32 %s122, 1
      %p126 = scmp.eq.s32.totalorder %s18, 3
      %p127 = scmp.ne.s32.totalorder %s122, %s124
      %p128 = scmp.eq.s32.totalorder %s18, 0
      %p129 = por %p127, %p128
      %p130 = scmp.ne.s32.totalorder %s122, %s124
      %p131 = scmp.eq.s32.totalorder %s23, 3
      %p132 = por %p130, %p131
      %p133 = scmp.ne.s32.totalorder %s124, %s125
      %p134 = scmp.eq.s32.totalorder %s23, 0
      %p135 = por %p133, %p134
      %p136 = scmp.ne.s32.totalorder %s124, %s125
      %p137 = scmp.eq.s32.totalorder %s24, 3
      %p138 = por %p136, %p137
      %p140 = scmp.ne.s32.totalorder %s125, %s139
      %p141 = scmp.eq.s32.totalorder %s24, 0
      %p142 = por %p140, %p141
      %s144 = sadd.s32 %s143, 1
      %p147 = scmp.eq.s32.totalorder %s18, 3
      %p148 = scmp.ne.s32.totalorder %s143, %s145
      %p149 = scmp.eq.s32.totalorder %s18, 0
      %p150 = por %p148, %p149
      %p151 = scmp.ne.s32.totalorder %s143, %s145
      %p152 = scmp.eq.s32.totalorder %s23, 3
      %p153 = por %p151, %p152
      %p154 = scmp.ne.s32.totalorder %s145, %s146
      %p155 = scmp.eq.s32.totalorder %s23, 0
      %p156 = por %p154, %p155
      %p157 = scmp.ne.s32.totalorder %s145, %s146
      %p158 = scmp.eq.s32.totalorder %s24, 3
      %p159 = por %p157, %p158
      %p161 = scmp.ne.s32.totalorder %s146, %s160
      %p162 = scmp.eq.s32.totalorder %s24, 0
      %p163 = por %p161, %p162
      %s165 = sadd.s32 %s164, 1
      %p168 = scmp.eq.s32.totalorder %s18, 3
      %p169 = scmp.ne.s32.totalorder %s164, %s166
      %p170 = scmp.eq.s32.totalorder %s18, 0
      %p171 = por %p169, %p170
      %p172 = scmp.ne.s32.totalorder %s164, %s166
      %p173 = scmp.eq.s32.totalorder %s23, 3
      %p174 = por %p172, %p173
      %p175 = scmp.ne.s32.totalorder %s166, %s167
      %p176 = scmp.eq.s32.totalorder %s23, 0
      %p177 = por %p175, %p176
      %p178 = scmp.ne.s32.totalorder %s166, %s167
      %p179 = scmp.eq.s32.totalorder %s24, 3
      %p180 = por %p178, %p179
      %p182 = scmp.ne.s32.totalorder %s167, %s181
      %p183 = scmp.eq.s32.totalorder %s24, 0
      %p184 = por %p182, %p183
      %s186 = sadd.s32 %s185, 1
      %p189 = scmp.eq.s32.totalorder %s18, 3
      %p190 = scmp.ne.s32.totalorder %s185, %s187
      %p191 = scmp.eq.s32.totalorder %s18, 0
      %p192 = por %p190, %p191
      %p193 = scmp.ne.s32.totalorder %s185, %s187
      %p194 = scmp.eq.s32.totalorder %s23, 3
      %p195 = por %p193, %p194
      %p196 = scmp.ne.s32.totalorder %s187, %s188
      %p197 = scmp.eq.s32.totalorder %s23, 0
      %p198 = por %p196, %p197
      %p199 = scmp.ne.s32.totalorder %s187, %s188
      %p200 = scmp.eq.s32.totalorder %s24, 3
      %p201 = por %p199, %p200
      %p203 = scmp.ne.s32.totalorder %s188, %s202
      %p204 = scmp.eq.s32.totalorder %s24, 0
      %p205 = por %p203, %p204
      %s207 = sadd.s32 %s206, 1
      %p210 = scmp.eq.s32.totalorder %s18, 3
      %p211 = scmp.ne.s32.totalorder %s206, %s208
      %p212 = scmp.eq.s32.totalorder %s18, 0
      %p213 = por %p211, %p212
      %p214 = scmp.ne.s32.totalorder %s206, %s208
      %p215 = scmp.eq.s32.totalorder %s23, 3
      %p216 = por %p214, %p215
      %p217 = scmp.ne.s32.totalorder %s208, %s209
      %p218 = scmp.eq.s32.totalorder %s23, 0
      %p219 = por %p217, %p218
      %p220 = scmp.ne.s32.totalorder %s208, %s209
      %p221 = scmp.eq.s32.totalorder %s24, 3
      %p222 = por %p220, %p221
      %p224 = scmp.ne.s32.totalorder %s209, %s223
      %p225 = scmp.eq.s32.totalorder %s24, 0
      %p226 = por %p224, %p225
      %s228 = sadd.s32 %s227, 1
      %p231 = scmp.eq.s32.totalorder %s18, 3
      %p232 = scmp.ne.s32.totalorder %s227, %s229
      %p233 = scmp.eq.s32.totalorder %s18, 0
      %p234 = por %p232, %p233
      %p235 = scmp.ne.s32.totalorder %s227, %s229
      %p236 = scmp.eq.s32.totalorder %s23, 3
      %p237 = por %p235, %p236
      %p238 = scmp.ne.s32.totalorder %s229, %s230
      %p239 = scmp.eq.s32.totalorder %s23, 0
      %p240 = por %p238, %p239
      %p241 = scmp.ne.s32.totalorder %s229, %s230
      %p242 = scmp.eq.s32.totalorder %s24, 3
      %p243 = por %p241, %p242
      %p245 = scmp.ne.s32.totalorder %s230, %s244
      %p246 = scmp.eq.s32.totalorder %s24, 0
      %p247 = por %p245, %p246
      %s248 = ssub.s32 %s25, %s37
      %s249 = ssub.s32 %s26, %s33
      %s250 = sor.u32 %s248, %s249
      %p251 = scmp.eq.s32.totalorder %s250, 0
      %s253 = sadd.s32 %s252, 1
      %s254 = scalar_select %p251, %s252, %s253
      %p257 = pneg %p251
      %p258 = scmp.eq.s32.totalorder %s18, 3
      %p259 = por %p257, %p258
      %p260 = scmp.ne.s32.totalorder %s252, %s255
      %p261 = scmp.eq.s32.totalorder %s18, 0
      %p262 = por %p260, %p261
      %p263 = scmp.ne.s32.totalorder %s252, %s255
      %p264 = scmp.eq.s32.totalorder %s23, 3
      %p265 = por %p263, %p264
      %p266 = scmp.ne.s32.totalorder %s255, %s256
      %p267 = scmp.eq.s32.totalorder %s23, 0
      %p268 = por %p266, %p267
      %p269 = scmp.ne.s32.totalorder %s255, %s256
      %p270 = scmp.eq.s32.totalorder %s24, 3
      %p271 = por %p269, %p270
      %p273 = scmp.ne.s32.totalorder %s256, %s272
      %p274 = scmp.eq.s32.totalorder %s24, 0
      %p275 = por %p273, %p274
      %s276 = ssub.s32 %s25, %s37
      %s277 = ssub.s32 %s26, %s33
      %s278 = sor.u32 %s276, %s277
      %p279 = scmp.eq.s32.totalorder %s278, 0
      %s281 = sadd.s32 %s280, 1
      %s282 = scalar_select %p279, %s280, %s281
      %p285 = pneg %p279
      %p286 = scmp.eq.s32.totalorder %s18, 3
      %p287 = por %p285, %p286
      %p288 = scmp.ne.s32.totalorder %s280, %s283
      %p289 = scmp.eq.s32.totalorder %s18, 0
      %p290 = por %p288, %p289
      %p291 = scmp.ne.s32.totalorder %s280, %s283
      %p292 = scmp.eq.s32.totalorder %s23, 3
      %p293 = por %p291, %p292
      %p294 = scmp.ne.s32.totalorder %s283, %s284
      %p295 = scmp.eq.s32.totalorder %s23, 0
      %p296 = por %p294, %p295
      %p297 = scmp.ne.s32.totalorder %s283, %s284
      %p298 = scmp.eq.s32.totalorder %s24, 3
      %p299 = por %p297, %p298
      %p301 = scmp.ne.s32.totalorder %s284, %s300
      %p302 = scmp.eq.s32.totalorder %s24, 0
      %p303 = por %p301, %p302
      %s304 = ssub.s32 %s25, %s37
      %s305 = ssub.s32 %s26, %s33
      %s306 = sor.u32 %s304, %s305
      %p307 = scmp.eq.s32.totalorder %s306, 0
      %s309 = sadd.s32 %s308, 1
      %s310 = scalar_select %p307, %s308, %s309
      %p313 = pneg %p307
      %p314 = scmp.eq.s32.totalorder %s18, 3
      %p315 = por %p313, %p314
      %p316 = scmp.ne.s32.totalorder %s308, %s311
      %p317 = scmp.eq.s32.totalorder %s18, 0
      %p318 = por %p316, %p317
      %p319 = scmp.ne.s32.totalorder %s308, %s311
      %p320 = scmp.eq.s32.totalorder %s23, 3
      %p321 = por %p319, %p320
      %p322 = scmp.ne.s32.totalorder %s311, %s312
      %p323 = scmp.eq.s32.totalorder %s23, 0
      %p324 = por %p322, %p323
      %p325 = scmp.ne.s32.totalorder %s311, %s312
      %p326 = scmp.eq.s32.totalorder %s24, 3
      %p327 = por %p325, %p326
      %p329 = scmp.ne.s32.totalorder %s312, %s328
      %p330 = scmp.eq.s32.totalorder %s24, 0
      %p331 = por %p329, %p330
      %p332 = scmp.le.s32.totalorder 1, %s18
      %p333 = scmp.lt.s32.totalorder %s18, 5
      %p334 = pnand %p332, %p333
      %p335 = pneg %p334
      // Predicated region
      $region9: #{tpu_custom_call.1} parent=5 // pred_check
        _
      $region10: #{tpu_custom_call.1} parent=5 // pred_check_branch
        %337 = sbr.rel (%p334) target = $region12
      $region11: #{tpu_custom_call.1} parent=5 // pred_region
        %s338 = ssub.s32 %s18, 1
        // Predicated region
        $region13: #{tpu_custom_call.1} parent=11 // pred_check
          %p339 = pneg %p135
        $region14: #{tpu_custom_call.1} parent=11 // pred_check_branch
          %341 = sbr.rel (%p339) target = $region16
        $region15: #{tpu_custom_call.1} parent=11 // pred_region
          _
        $region16: #{tpu_custom_call.1} parent=11 // pred_fallthru
          _
        // Predicated region
        $region17: #{tpu_custom_call.1} parent=11 // pred_check
          %p342 = pneg %p156
        $region18: #{tpu_custom_call.1} parent=11 // pred_check_branch
          %344 = sbr.rel (%p342) target = $region20
        $region19: #{tpu_custom_call.1} parent=11 // pred_region
          _
        $region20: #{tpu_custom_call.1} parent=11 // pred_fallthru
          _
        // Predicated region
        $region21: #{tpu_custom_call.1} parent=11 // pred_check
          %p345 = pneg %p177
        $region22: #{tpu_custom_call.1} parent=11 // pred_check_branch
          %347 = sbr.rel (%p345) target = $region24
        $region23: #{tpu_custom_call.1} parent=11 // pred_region
          _
        $region24: #{tpu_custom_call.1} parent=11 // pred_fallthru
          _
        // Predicated region
        $region25: #{tpu_custom_call.1} parent=11 // pred_check
          %p348 = pneg %p198
        $region26: #{tpu_custom_call.1} parent=11 // pred_check_branch
          %350 = sbr.rel (%p348) target = $region28
        $region27: #{tpu_custom_call.1} parent=11 // pred_region
          _
        $region28: #{tpu_custom_call.1} parent=11 // pred_fallthru
          _
        // Predicated region
        $region29: #{tpu_custom_call.1} parent=11 // pred_check
          %p351 = pneg %p219
        $region30: #{tpu_custom_call.1} parent=11 // pred_check_branch
          %353 = sbr.rel (%p351) target = $region32
        $region31: #{tpu_custom_call.1} parent=11 // pred_region
          _
        $region32: #{tpu_custom_call.1} parent=11 // pred_fallthru
          _
        // Predicated region
        $region33: #{tpu_custom_call.1} parent=11 // pred_check
          %p354 = pneg %p240
        $region34: #{tpu_custom_call.1} parent=11 // pred_check_branch
          %356 = sbr.rel (%p354) target = $region36
        $region35: #{tpu_custom_call.1} parent=11 // pred_region
          _
        $region36: #{tpu_custom_call.1} parent=11 // pred_fallthru
          _
      $region12: #{tpu_custom_call.1} parent=5 // pred_fallthru
        _
      %p357 = scmp.lt.s32.totalorder %s18, 4
      // Predicated region
      $region37: #{tpu_custom_call.1} parent=5 // pred_check
        %p358 = pneg %p357
      $region38: #{tpu_custom_call.1} parent=5 // pred_check_branch
        %360 = sbr.rel (%p358) target = $region40
      $region39: #{tpu_custom_call.1} parent=5 // pred_region
        // Predicated region
        $region41: #{tpu_custom_call.1} parent=39 // pred_check
          %p361 = pneg %p52
        $region42: #{tpu_custom_call.1} parent=39 // pred_check_branch
          %363 = sbr.rel (%p361) target = $region44
        $region43: #{tpu_custom_call.1} parent=39 // pred_region
          %p364 = scmp.lt.s32.totalorder %s25, 1
          %s365 = scalar_select %p364, %s25, 1
          %p366 = scmp.lt.s32.totalorder %s26, 1
          %s367 = scalar_select %p366, %s26, 1
          %s368 = smul.addr %s365, 2
          %s369 = sadd.s32 %s367, %s368
          %s370 = smul.addr %s369, 8
          %s371 = scalar_lea.vmem %s0, %s370
        $region44: #{tpu_custom_call.1} parent=39 // pred_fallthru
          _
        // Predicated region
        $region45: #{tpu_custom_call.1} parent=39 // pred_check
          %p372 = pneg %p80
        $region46: #{tpu_custom_call.1} parent=39 // pred_check_branch
          %374 = sbr.rel (%p372) target = $region48
        $region47: #{tpu_custom_call.1} parent=39 // pred_region
          %p375 = scmp.lt.s32.totalorder %s25, 1
          %s376 = scalar_select %p375, %s25, 1
          %p377 = scmp.lt.s32.totalorder %s26, 1
          %s378 = scalar_select %p377, %s26, 1
          %s379 = smul.addr %s376, 2
          %s380 = sadd.s32 %s378, %s379
          %s381 = smul.addr %s380, 8
          %s382 = scalar_lea.vmem %s1, %s381
        $region48: #{tpu_custom_call.1} parent=39 // pred_fallthru
          _
        // Predicated region
        $region49: #{tpu_custom_call.1} parent=39 // pred_check
          %p383 = pneg %p108
        $region50: #{tpu_custom_call.1} parent=39 // pred_check_branch
          %385 = sbr.rel (%p383) target = $region52
        $region51: #{tpu_custom_call.1} parent=39 // pred_region
          %p386 = scmp.lt.s32.totalorder %s25, 1
          %s387 = scalar_select %p386, %s25, 1
          %p388 = scmp.lt.s32.totalorder %s26, 1
          %s389 = scalar_select %p388, %s26, 1
          %s390 = smul.addr %s387, 2
          %s391 = sadd.s32 %s389, %s390
          %s392 = smul.addr %s391, 8
          %s393 = scalar_lea.vmem %s2, %s392
        $region52: #{tpu_custom_call.1} parent=39 // pred_fallthru
          _
      $region40: #{tpu_custom_call.1} parent=5 // pred_fallthru
        _
      %p394 = scmp.le.s32.totalorder 1, %s18
      %p395 = scmp.lt.s32.totalorder %s18, 5
      %p396 = pnand %p394, %p395
      %p397 = pneg %p396
      // Predicated region
      $region53: #{tpu_custom_call.1} parent=5 // pred_check
        _
      $region54: #{tpu_custom_call.1} parent=5 // pred_check_branch
        %399 = sbr.rel (%p396) target = $region56
      $region55: #{tpu_custom_call.1} parent=5 // pred_region
        %s400 = ssub.s32 %s18, 1
        %p401 = scmp.lt.s32.totalorder %s27, 1
        %s402 = scalar_select %p401, %s27, 1
        %p403 = scmp.lt.s32.totalorder %s28, 1
        %s404 = scalar_select %p403, %s28, 1
        %s405 = smul.addr %s402, 2
        %s406 = sadd.s32 %s404, %s405
        %s407 = smul.addr %s406, 8
        %s408 = scalar_lea.vmem %s0, %s407
        %p409 = pneg %p58
        %p410 = pneg %p55
        %p411 = scmp.lt.s32.totalorder %s27, 1
        %s412 = scalar_select %p411, %s27, 1
        %p413 = scmp.lt.s32.totalorder %s28, 1
        %s414 = scalar_select %p413, %s28, 1
        %s415 = smul.addr %s412, 2
        %s416 = sadd.s32 %s414, %s415
        %s417 = smul.addr %s416, 8
        %s418 = scalar_lea.vmem %s1, %s417
        %p419 = pneg %p86
        %p420 = pneg %p83
        %p421 = scmp.lt.s32.totalorder %s27, 1
        %s422 = scalar_select %p421, %s27, 1
        %p423 = scmp.lt.s32.totalorder %s28, 1
        %s424 = scalar_select %p423, %s28, 1
        %s425 = smul.addr %s422, 2
        %s426 = sadd.s32 %s424, %s425
        %s427 = smul.addr %s426, 8
        %s428 = scalar_lea.vmem %s2, %s427
        %p429 = pneg %p114
        %p430 = pneg %p111
        %p431 = pneg %p135
        %p432 = pneg %p132
        %p433 = pneg %p156
        %p434 = pneg %p153
        %p435 = pneg %p177
        %p436 = pneg %p174
        %p437 = pneg %p198
        %p438 = pneg %p195
        %p439 = pneg %p219
        %p440 = pneg %p216
        %p441 = pneg %p240
        %p442 = pneg %p237
        %p443 = pneg %p268
        %p444 = pneg %p265
        %s445 = sand.u32 %s255, 1
        %s446 = sand.u32 %s255, 1
        %s447 = smul.addr %s446, 32
        %s448 = scalar_lea.vmem [#allocation2], %s447
        %p449 = pneg %p296
        %p450 = pneg %p293
        %s451 = sand.u32 %s283, 1
        %s452 = sand.u32 %s283, 1
        %s453 = smul.addr %s452, 32
        %s454 = scalar_lea.vmem [#allocation3], %s453
        %p455 = pneg %p324
        %p456 = pneg %p321
        %s457 = sand.u32 %s311, 1
        %s458 = sand.u32 %s311, 1
        %s459 = smul.addr %s458, 32
        %s460 = scalar_lea.vmem [#allocation4], %s459
        %p461 = scmp.lt.s32.totalorder %s27, 1
        %s462 = scalar_select %p461, %s27, 1
        %p463 = scmp.lt.s32.totalorder %s28, 1
        %s464 = scalar_select %p463, %s28, 1
        %s465 = smul.addr %s462, 2
        %s466 = sadd.s32 %s464, %s465
        %s467 = smul.addr %s466, 8
        %s468 = scalar_lea.vmem %s0, %s467
        %p469 = scmp.lt.s32.totalorder %s27, 1
        %s470 = scalar_select %p469, %s27, 1
        %p471 = scmp.lt.s32.totalorder %s28, 1
        %s472 = scalar_select %p471, %s28, 1
        %s473 = smul.addr %s470, 2
        %s474 = sadd.s32 %s472, %s473
        %s475 = smul.addr %s474, 8
        %s476 = scalar_lea.vmem %s1, %s475
        %p477 = scmp.lt.s32.totalorder %s27, 1
        %s478 = scalar_select %p477, %s27, 1
        %p479 = scmp.lt.s32.totalorder %s28, 1
        %s480 = scalar_select %p479, %s28, 1
        %s481 = smul.addr %s478, 2
        %s482 = sadd.s32 %s480, %s481
        %s483 = smul.addr %s482, 8
        %s484 = scalar_lea.vmem %s2, %s483
        %v485 = vld [vmem:[%s468] sm:$0xff]
        %v486 = vld [vmem:[%s476] sm:$0xff]
        %v487 = vld [vmem:[%s484] sm:$0xff]
        %v488 = vld [vmem:[%s3] sm:$0xff]
        %v489 = vld [vmem:[%s3 + $0x8] sm:$0xff]
        %v490 = vld [vmem:[%s3 + $0x10] sm:$0xff]
        %v491 = vld [vmem:[%s3 + $0x18] sm:$0xff]
        %v492 = vld [vmem:[%s6] sm:$0x1]
        %v494 = vlaneseq
        %v495 = vshrl.u32 %v494, 7
        %v496 = vsub.s32 0, %v495
        %v497 = vrot.slane %v492, %v496
        %vm499 = vcmask 261120
        %v501 = vsel %vm499, %v485, 0
        %503 = vmatprep.subr.mxu0 0.0
        %504 = vmatpush1.msra.mxu0 0.0
        %505 = vmatprep.subr.mxu0 0.0
        %506 = vmatpush1.msra.mxu0 0.0
        %507 = vmatprep.subr.mxu0 0.0
        %508 = vmatpush1.msra.mxu0 0.0
        %509 = vmatprep.subr.mxu0 0.0
        %510 = vmatpush1.msra.mxu0 0.0
        %511 = vmatprep.subr.mxu0 0.0
        %512 = vmatpush1.msra.mxu0 0.0
        %513 = vmatprep.subr.mxu0 0.0
        %514 = vmatpush1.msra.mxu0 0.0
        %515 = vmatprep.subr.mxu0 0.0
        %516 = vmatpush1.msra.mxu0 0.0
        %517 = vmatprep.subr.mxu0 0.0
        %518 = vmatpush1.msra.mxu0 0.0
        %519 = vmatprep.subr.mxu0 0.0
        %520 = vmatpush1.msra.mxu0 0.0
        %521 = vmatprep.subr.mxu0 0.0
        %522 = vmatpush1.msra.mxu0 0.0
        %523 = vmatprep.subr.mxu0 0.0
        %524 = vmatpush1.msra.mxu0 0.0
        %525 = vmatprep.subr.mxu0 0.0
        %526 = vmatpush1.msra.mxu0 0.0
        %527 = vmatprep.subr.mxu0 0.0
        %528 = vmatpush1.msra.mxu0 %v491
        %529 = vmatprep.subr.mxu0 0.0
        %530 = vmatpush1.msra.mxu0 %v490
        %531 = vmatprep.subr.mxu0 0.0
        %532 = vmatpush1.msra.mxu0 %v489
        %533 = vmatprep.subr.mxu0 0.0
        %534 = vmatpush1.msra.mxu0 %v488
        %535 = vmatprep.subr.mxu0 0.0
        %536 = vmatpush2.msra.mxu0 0.0
        %537 = vmatprep.subr.mxu0 0.0
        %538 = vmatpush2.msra.mxu0 0.0
        %539 = vmatprep.subr.mxu0 0.0
        %540 = vmatpush2.msra.mxu0 0.0
        %541 = vmatprep.subr.mxu0 0.0
        %542 = vmatpush2.msra.mxu0 0.0
        %543 = vmatprep.subr.mxu0 0.0
        %544 = vmatpush2.msra.mxu0 0.0
        %545 = vmatprep.subr.mxu0 0.0
        %546 = vmatpush2.msra.mxu0 0.0
        %547 = vmatprep.subr.mxu0 0.0
        %548 = vmatpush2.msra.mxu0 0.0
        %549 = vmatprep.subr.mxu0 0.0
        %550 = vmatpush2.msra.mxu0 0.0
        %551 = vmatprep.subr.mxu0 0.0
        %552 = vmatpush2.msra.mxu0 0.0
        %553 = vmatprep.subr.mxu0 0.0
        %554 = vmatpush2.msra.mxu0 0.0
        %555 = vmatprep.subr.mxu0 0.0
        %556 = vmatpush2.msra.mxu0 0.0
        %557 = vmatprep.subr.mxu0 0.0
        %558 = vmatpush2.msra.mxu0 0.0
        %559 = vmatprep.subr.mxu0 0.0
        %560 = vmatpush2.msra.mxu0 0.0
        %561 = vmatprep.subr.mxu0 0.0
        %562 = vmatpush2.msra.mxu0 0.0
        %563 = vmatprep.subr.mxu0 0.0
        %564 = vmatpush2.msra.mxu0 0.0
        %565 = vmatprep.subr.mxu0 0.0
        %566 = vmatpush2.msra.mxu0 0.0
        %567 = vmatprep.mubr.f32.mxu0 0.0
        %568 = vmatmul.mubr.f32.gmra.mxu0 %v501
        %v569 = vpop.f32.mrf.mxu0
        %v570 = vadd.f32 %v497, %v569
        %v571 = vpop.f32.mrf.mxu0
        %572 = vdwg.mxu0
        %vm573 = vcmask 64512
        %574 = vst.msk [vmem:[%s448] sm:$0xff] %vm573, %v570
        %v575 = vld [vmem:[%s4] sm:$0xff]
        %v576 = vld [vmem:[%s4 + $0x8] sm:$0xff]
        %v577 = vld [vmem:[%s4 + $0x10] sm:$0xff]
        %v578 = vld [vmem:[%s4 + $0x18] sm:$0xff]
        %v579 = vld [vmem:[%s7] sm:$0x1]
        %v581 = vlaneseq
        %v582 = vshrl.u32 %v581, 7
        %v583 = vsub.s32 0, %v582
        %v584 = vrot.slane %v579, %v583
        %v587 = vsel %vm499, %v486, 0
        %589 = vmatprep.subr.mxu0 0.0
        %590 = vmatpush1.msra.mxu0 0.0
        %591 = vmatprep.subr.mxu0 0.0
        %592 = vmatpush1.msra.mxu0 0.0
        %593 = vmatprep.subr.mxu0 0.0
        %594 = vmatpush1.msra.mxu0 0.0
        %595 = vmatprep.subr.mxu0 0.0
        %596 = vmatpush1.msra.mxu0 0.0
        %597 = vmatprep.subr.mxu0 0.0
        %598 = vmatpush1.msra.mxu0 0.0
        %599 = vmatprep.subr.mxu0 0.0
        %600 = vmatpush1.msra.mxu0 0.0
        %601 = vmatprep.subr.mxu0 0.0
        %602 = vmatpush1.msra.mxu0 0.0
        %603 = vmatprep.subr.mxu0 0.0
        %604 = vmatpush1.msra.mxu0 0.0
        %605 = vmatprep.subr.mxu0 0.0
        %606 = vmatpush1.msra.mxu0 0.0
        %607 = vmatprep.subr.mxu0 0.0
        %608 = vmatpush1.msra.mxu0 0.0
        %609 = vmatprep.subr.mxu0 0.0
        %610 = vmatpush1.msra.mxu0 0.0
        %611 = vmatprep.subr.mxu0 0.0
        %612 = vmatpush1.msra.mxu0 0.0
        %613 = vmatprep.subr.mxu0 0.0
        %614 = vmatpush1.msra.mxu0 %v578
        %615 = vmatprep.subr.mxu0 0.0
        %616 = vmatpush1.msra.mxu0 %v577
        %617 = vmatprep.subr.mxu0 0.0
        %618 = vmatpush1.msra.mxu0 %v576
        %619 = vmatprep.subr.mxu0 0.0
        %620 = vmatpush1.msra.mxu0 %v575
        %621 = vmatprep.subr.mxu0 0.0
        %622 = vmatpush2.msra.mxu0 0.0
        %623 = vmatprep.subr.mxu0 0.0
        %624 = vmatpush2.msra.mxu0 0.0
        %625 = vmatprep.subr.mxu0 0.0
        %626 = vmatpush2.msra.mxu0 0.0
        %627 = vmatprep.subr.mxu0 0.0
        %628 = vmatpush2.msra.mxu0 0.0
        %629 = vmatprep.subr.mxu0 0.0
        %630 = vmatpush2.msra.mxu0 0.0
        %631 = vmatprep.subr.mxu0 0.0
        %632 = vmatpush2.msra.mxu0 0.0
        %633 = vmatprep.subr.mxu0 0.0
        %634 = vmatpush2.msra.mxu0 0.0
        %635 = vmatprep.subr.mxu0 0.0
        %636 = vmatpush2.msra.mxu0 0.0
        %637 = vmatprep.subr.mxu0 0.0
        %638 = vmatpush2.msra.mxu0 0.0
        %639 = vmatprep.subr.mxu0 0.0
        %640 = vmatpush2.msra.mxu0 0.0
        %641 = vmatprep.subr.mxu0 0.0
        %642 = vmatpush2.msra.mxu0 0.0
        %643 = vmatprep.subr.mxu0 0.0
        %644 = vmatpush2.msra.mxu0 0.0
        %645 = vmatprep.subr.mxu0 0.0
        %646 = vmatpush2.msra.mxu0 0.0
        %647 = vmatprep.subr.mxu0 0.0
        %648 = vmatpush2.msra.mxu0 0.0
        %649 = vmatprep.subr.mxu0 0.0
        %650 = vmatpush2.msra.mxu0 0.0
        %651 = vmatprep.subr.mxu0 0.0
        %652 = vmatpush2.msra.mxu0 0.0
        %653 = vmatprep.mubr.f32.mxu0 0.0
        %654 = vmatmul.mubr.f32.gmra.mxu0 %v587
        %v655 = vpop.f32.mrf.mxu0
        %v656 = vadd.f32 %v584, %v655
        %v657 = vpop.f32.mrf.mxu0
        %658 = vdwg.mxu0
        %659 = vst.msk [vmem:[%s454] sm:$0xff] %vm573, %v656
        %v660 = vld [vmem:[%s5] sm:$0xff]
        %v661 = vld [vmem:[%s5 + $0x8] sm:$0xff]
        %v662 = vld [vmem:[%s5 + $0x10] sm:$0xff]
        %v663 = vld [vmem:[%s5 + $0x18] sm:$0xff]
        %v664 = vld [vmem:[%s8] sm:$0x1]
        %v666 = vlaneseq
        %v667 = vshrl.u32 %v666, 7
        %v668 = vsub.s32 0, %v667
        %v669 = vrot.slane %v664, %v668
        %v672 = vsel %vm499, %v487, 0
        %674 = vmatprep.subr.mxu0 0.0
        %675 = vmatpush1.msra.mxu0 0.0
        %676 = vmatprep.subr.mxu0 0.0
        %677 = vmatpush1.msra.mxu0 0.0
        %678 = vmatprep.subr.mxu0 0.0
        %679 = vmatpush1.msra.mxu0 0.0
        %680 = vmatprep.subr.mxu0 0.0
        %681 = vmatpush1.msra.mxu0 0.0
        %682 = vmatprep.subr.mxu0 0.0
        %683 = vmatpush1.msra.mxu0 0.0
        %684 = vmatprep.subr.mxu0 0.0
        %685 = vmatpush1.msra.mxu0 0.0
        %686 = vmatprep.subr.mxu0 0.0
        %687 = vmatpush1.msra.mxu0 0.0
        %688 = vmatprep.subr.mxu0 0.0
        %689 = vmatpush1.msra.mxu0 0.0
        %690 = vmatprep.subr.mxu0 0.0
        %691 = vmatpush1.msra.mxu0 0.0
        %692 = vmatprep.subr.mxu0 0.0
        %693 = vmatpush1.msra.mxu0 0.0
        %694 = vmatprep.subr.mxu0 0.0
        %695 = vmatpush1.msra.mxu0 0.0
        %696 = vmatprep.subr.mxu0 0.0
        %697 = vmatpush1.msra.mxu0 0.0
        %698 = vmatprep.subr.mxu0 0.0
        %699 = vmatpush1.msra.mxu0 %v663
        %700 = vmatprep.subr.mxu0 0.0
        %701 = vmatpush1.msra.mxu0 %v662
        %702 = vmatprep.subr.mxu0 0.0
        %703 = vmatpush1.msra.mxu0 %v661
        %704 = vmatprep.subr.mxu0 0.0
        %705 = vmatpush1.msra.mxu0 %v660
        %706 = vmatprep.subr.mxu0 0.0
        %707 = vmatpush2.msra.mxu0 0.0
        %708 = vmatprep.subr.mxu0 0.0
        %709 = vmatpush2.msra.mxu0 0.0
        %710 = vmatprep.subr.mxu0 0.0
        %711 = vmatpush2.msra.mxu0 0.0
        %712 = vmatprep.subr.mxu0 0.0
        %713 = vmatpush2.msra.mxu0 0.0
        %714 = vmatprep.subr.mxu0 0.0
        %715 = vmatpush2.msra.mxu0 0.0
        %716 = vmatprep.subr.mxu0 0.0
        %717 = vmatpush2.msra.mxu0 0.0
        %718 = vmatprep.subr.mxu0 0.0
        %719 = vmatpush2.msra.mxu0 0.0
        %720 = vmatprep.subr.mxu0 0.0
        %721 = vmatpush2.msra.mxu0 0.0
        %722 = vmatprep.subr.mxu0 0.0
        %723 = vmatpush2.msra.mxu0 0.0
        %724 = vmatprep.subr.mxu0 0.0
        %725 = vmatpush2.msra.mxu0 0.0
        %726 = vmatprep.subr.mxu0 0.0
        %727 = vmatpush2.msra.mxu0 0.0
        %728 = vmatprep.subr.mxu0 0.0
        %729 = vmatpush2.msra.mxu0 0.0
        %730 = vmatprep.subr.mxu0 0.0
        %731 = vmatpush2.msra.mxu0 0.0
        %732 = vmatprep.subr.mxu0 0.0
        %733 = vmatpush2.msra.mxu0 0.0
        %734 = vmatprep.subr.mxu0 0.0
        %735 = vmatpush2.msra.mxu0 0.0
        %736 = vmatprep.subr.mxu0 0.0
        %737 = vmatpush2.msra.mxu0 0.0
        %738 = vmatprep.mubr.f32.mxu0 0.0
        %739 = vmatmul.mubr.f32.gmra.mxu0 %v672
        %v740 = vpop.f32.mrf.mxu0
        %v741 = vadd.f32 %v669, %v740
        %v742 = vpop.f32.mrf.mxu0
        %743 = vdwg.mxu0
        %744 = vst.msk [vmem:[%s460] sm:$0xff] %vm573, %v741
        %s745 = scalar_lea.vmem %s3, 32
        %v746 = vld [vmem:[%s745] sm:$0xff]
        %v747 = vld [vmem:[%s745 + $0x8] sm:$0xff]
        %v748 = vld [vmem:[%s745 + $0x10] sm:$0xff]
        %v749 = vld [vmem:[%s745 + $0x18] sm:$0xff]
        %s750 = scalar_lea.vmem %s6, 1
        %v751 = vld [vmem:[%s750] sm:$0x1]
        %v753 = vlaneseq
        %v754 = vshrl.u32 %v753, 7
        %v755 = vsub.s32 0, %v754
        %v756 = vrot.slane %v751, %v755
        %758 = vmatprep.subr.mxu0 0.0
        %759 = vmatpush1.msra.mxu0 0.0
        %760 = vmatprep.subr.mxu0 0.0
        %761 = vmatpush1.msra.mxu0 0.0
        %762 = vmatprep.subr.mxu0 0.0
        %763 = vmatpush1.msra.mxu0 0.0
        %764 = vmatprep.subr.mxu0 0.0
        %765 = vmatpush1.msra.mxu0 0.0
        %766 = vmatprep.subr.mxu0 0.0
        %767 = vmatpush1.msra.mxu0 0.0
        %768 = vmatprep.subr.mxu0 0.0
        %769 = vmatpush1.msra.mxu0 0.0
        %770 = vmatprep.subr.mxu0 0.0
        %771 = vmatpush1.msra.mxu0 0.0
        %772 = vmatprep.subr.mxu0 0.0
        %773 = vmatpush1.msra.mxu0 0.0
        %774 = vmatprep.subr.mxu0 0.0
        %775 = vmatpush1.msra.mxu0 0.0
        %776 = vmatprep.subr.mxu0 0.0
        %777 = vmatpush1.msra.mxu0 0.0
        %778 = vmatprep.subr.mxu0 0.0
        %779 = vmatpush1.msra.mxu0 0.0
        %780 = vmatprep.subr.mxu0 0.0
        %781 = vmatpush1.msra.mxu0 0.0
        %782 = vmatprep.subr.mxu0 0.0
        %783 = vmatpush1.msra.mxu0 %v749
        %784 = vmatprep.subr.mxu0 0.0
        %785 = vmatpush1.msra.mxu0 %v748
        %786 = vmatprep.subr.mxu0 0.0
        %787 = vmatpush1.msra.mxu0 %v747
        %788 = vmatprep.subr.mxu0 0.0
        %789 = vmatpush1.msra.mxu0 %v746
        %790 = vmatprep.subr.mxu0 0.0
        %791 = vmatpush2.msra.mxu0 0.0
        %792 = vmatprep.subr.mxu0 0.0
        %793 = vmatpush2.msra.mxu0 0.0
        %794 = vmatprep.subr.mxu0 0.0
        %795 = vmatpush2.msra.mxu0 0.0
        %796 = vmatprep.subr.mxu0 0.0
        %797 = vmatpush2.msra.mxu0 0.0
        %798 = vmatprep.subr.mxu0 0.0
        %799 = vmatpush2.msra.mxu0 0.0
        %800 = vmatprep.subr.mxu0 0.0
        %801 = vmatpush2.msra.mxu0 0.0
        %802 = vmatprep.subr.mxu0 0.0
        %803 = vmatpush2.msra.mxu0 0.0
        %804 = vmatprep.subr.mxu0 0.0
        %805 = vmatpush2.msra.mxu0 0.0
        %806 = vmatprep.subr.mxu0 0.0
        %807 = vmatpush2.msra.mxu0 0.0
        %808 = vmatprep.subr.mxu0 0.0
        %809 = vmatpush2.msra.mxu0 0.0
        %810 = vmatprep.subr.mxu0 0.0
        %811 = vmatpush2.msra.mxu0 0.0
        %812 = vmatprep.subr.mxu0 0.0
        %813 = vmatpush2.msra.mxu0 0.0
        %814 = vmatprep.subr.mxu0 0.0
        %815 = vmatpush2.msra.mxu0 0.0
        %816 = vmatprep.subr.mxu0 0.0
        %817 = vmatpush2.msra.mxu0 0.0
        %818 = vmatprep.subr.mxu0 0.0
        %819 = vmatpush2.msra.mxu0 0.0
        %820 = vmatprep.subr.mxu0 0.0
        %821 = vmatpush2.msra.mxu0 0.0
        %822 = vmatprep.mubr.f32.mxu0 0.0
        %823 = vmatmul.mubr.f32.gmra.mxu0 %v501
        %v824 = vpop.f32.mrf.mxu0
        %v825 = vadd.f32 %v756, %v824
        %v826 = vpop.f32.mrf.mxu0
        %827 = vdwg.mxu0
        %s828 = scalar_lea.vmem %s448, 8 [#allocation2]
        %829 = vst.msk [vmem:[%s828] sm:$0xff] %vm573, %v825
        %s830 = scalar_lea.vmem %s4, 32
        %v831 = vld [vmem:[%s830] sm:$0xff]
        %v832 = vld [vmem:[%s830 + $0x8] sm:$0xff]
        %v833 = vld [vmem:[%s830 + $0x10] sm:$0xff]
        %v834 = vld [vmem:[%s830 + $0x18] sm:$0xff]
        %s835 = scalar_lea.vmem %s7, 1
        %v836 = vld [vmem:[%s835] sm:$0x1]
        %v838 = vlaneseq
        %v839 = vshrl.u32 %v838, 7
        %v840 = vsub.s32 0, %v839
        %v841 = vrot.slane %v836, %v840
        %843 = vmatprep.subr.mxu0 0.0
        %844 = vmatpush1.msra.mxu0 0.0
        %845 = vmatprep.subr.mxu0 0.0
        %846 = vmatpush1.msra.mxu0 0.0
        %847 = vmatprep.subr.mxu0 0.0
        %848 = vmatpush1.msra.mxu0 0.0
        %849 = vmatprep.subr.mxu0 0.0
        %850 = vmatpush1.msra.mxu0 0.0
        %851 = vmatprep.subr.mxu0 0.0
        %852 = vmatpush1.msra.mxu0 0.0
        %853 = vmatprep.subr.mxu0 0.0
        %854 = vmatpush1.msra.mxu0 0.0
        %855 = vmatprep.subr.mxu0 0.0
        %856 = vmatpush1.msra.mxu0 0.0
        %857 = vmatprep.subr.mxu0 0.0
        %858 = vmatpush1.msra.mxu0 0.0
        %859 = vmatprep.subr.mxu0 0.0
        %860 = vmatpush1.msra.mxu0 0.0
        %861 = vmatprep.subr.mxu0 0.0
        %862 = vmatpush1.msra.mxu0 0.0
        %863 = vmatprep.subr.mxu0 0.0
        %864 = vmatpush1.msra.mxu0 0.0
        %865 = vmatprep.subr.mxu0 0.0
        %866 = vmatpush1.msra.mxu0 0.0
        %867 = vmatprep.subr.mxu0 0.0
        %868 = vmatpush1.msra.mxu0 %v834
        %869 = vmatprep.subr.mxu0 0.0
        %870 = vmatpush1.msra.mxu0 %v833
        %871 = vmatprep.subr.mxu0 0.0
        %872 = vmatpush1.msra.mxu0 %v832
        %873 = vmatprep.subr.mxu0 0.0
        %874 = vmatpush1.msra.mxu0 %v831
        %875 = vmatprep.subr.mxu0 0.0
        %876 = vmatpush2.msra.mxu0 0.0
        %877 = vmatprep.subr.mxu0 0.0
        %878 = vmatpush2.msra.mxu0 0.0
        %879 = vmatprep.subr.mxu0 0.0
        %880 = vmatpush2.msra.mxu0 0.0
        %881 = vmatprep.subr.mxu0 0.0
        %882 = vmatpush2.msra.mxu0 0.0
        %883 = vmatprep.subr.mxu0 0.0
        %884 = vmatpush2.msra.mxu0 0.0
        %885 = vmatprep.subr.mxu0 0.0
        %886 = vmatpush2.msra.mxu0 0.0
        %887 = vmatprep.subr.mxu0 0.0
        %888 = vmatpush2.msra.mxu0 0.0
        %889 = vmatprep.subr.mxu0 0.0
        %890 = vmatpush2.msra.mxu0 0.0
        %891 = vmatprep.subr.mxu0 0.0
        %892 = vmatpush2.msra.mxu0 0.0
        %893 = vmatprep.subr.mxu0 0.0
        %894 = vmatpush2.msra.mxu0 0.0
        %895 = vmatprep.subr.mxu0 0.0
        %896 = vmatpush2.msra.mxu0 0.0
        %897 = vmatprep.subr.mxu0 0.0
        %898 = vmatpush2.msra.mxu0 0.0
        %899 = vmatprep.subr.mxu0 0.0
        %900 = vmatpush2.msra.mxu0 0.0
        %901 = vmatprep.subr.mxu0 0.0
        %902 = vmatpush2.msra.mxu0 0.0
        %903 = vmatprep.subr.mxu0 0.0
        %904 = vmatpush2.msra.mxu0 0.0
        %905 = vmatprep.subr.mxu0 0.0
        %906 = vmatpush2.msra.mxu0 0.0
        %907 = vmatprep.mubr.f32.mxu0 0.0
        %908 = vmatmul.mubr.f32.gmra.mxu0 %v587
        %v909 = vpop.f32.mrf.mxu0
        %v910 = vadd.f32 %v841, %v909
        %v911 = vpop.f32.mrf.mxu0
        %912 = vdwg.mxu0
        %s913 = scalar_lea.vmem %s454, 8 [#allocation3]
        %914 = vst.msk [vmem:[%s913] sm:$0xff] %vm573, %v910
        %s915 = scalar_lea.vmem %s5, 32
        %v916 = vld [vmem:[%s915] sm:$0xff]
        %v917 = vld [vmem:[%s915 + $0x8] sm:$0xff]
        %v918 = vld [vmem:[%s915 + $0x10] sm:$0xff]
        %v919 = vld [vmem:[%s915 + $0x18] sm:$0xff]
        %s920 = scalar_lea.vmem %s8, 1
        %v921 = vld [vmem:[%s920] sm:$0x1]
        %v923 = vlaneseq
        %v924 = vshrl.u32 %v923, 7
        %v925 = vsub.s32 0, %v924
        %v926 = vrot.slane %v921, %v925
        %928 = vmatprep.subr.mxu0 0.0
        %929 = vmatpush1.msra.mxu0 0.0
        %930 = vmatprep.subr.mxu0 0.0
        %931 = vmatpush1.msra.mxu0 0.0
        %932 = vmatprep.subr.mxu0 0.0
        %933 = vmatpush1.msra.mxu0 0.0
        %934 = vmatprep.subr.mxu0 0.0
        %935 = vmatpush1.msra.mxu0 0.0
        %936 = vmatprep.subr.mxu0 0.0
        %937 = vmatpush1.msra.mxu0 0.0
        %938 = vmatprep.subr.mxu0 0.0
        %939 = vmatpush1.msra.mxu0 0.0
        %940 = vmatprep.subr.mxu0 0.0
        %941 = vmatpush1.msra.mxu0 0.0
        %942 = vmatprep.subr.mxu0 0.0
        %943 = vmatpush1.msra.mxu0 0.0
        %944 = vmatprep.subr.mxu0 0.0
        %945 = vmatpush1.msra.mxu0 0.0
        %946 = vmatprep.subr.mxu0 0.0
        %947 = vmatpush1.msra.mxu0 0.0
        %948 = vmatprep.subr.mxu0 0.0
        %949 = vmatpush1.msra.mxu0 0.0
        %950 = vmatprep.subr.mxu0 0.0
        %951 = vmatpush1.msra.mxu0 0.0
        %952 = vmatprep.subr.mxu0 0.0
        %953 = vmatpush1.msra.mxu0 %v919
        %954 = vmatprep.subr.mxu0 0.0
        %955 = vmatpush1.msra.mxu0 %v918
        %956 = vmatprep.subr.mxu0 0.0
        %957 = vmatpush1.msra.mxu0 %v917
        %958 = vmatprep.subr.mxu0 0.0
        %959 = vmatpush1.msra.mxu0 %v916
        %960 = vmatprep.subr.mxu0 0.0
        %961 = vmatpush2.msra.mxu0 0.0
        %962 = vmatprep.subr.mxu0 0.0
        %963 = vmatpush2.msra.mxu0 0.0
        %964 = vmatprep.subr.mxu0 0.0
        %965 = vmatpush2.msra.mxu0 0.0
        %966 = vmatprep.subr.mxu0 0.0
        %967 = vmatpush2.msra.mxu0 0.0
        %968 = vmatprep.subr.mxu0 0.0
        %969 = vmatpush2.msra.mxu0 0.0
        %970 = vmatprep.subr.mxu0 0.0
        %971 = vmatpush2.msra.mxu0 0.0
        %972 = vmatprep.subr.mxu0 0.0
        %973 = vmatpush2.msra.mxu0 0.0
        %974 = vmatprep.subr.mxu0 0.0
        %975 = vmatpush2.msra.mxu0 0.0
        %976 = vmatprep.subr.mxu0 0.0
        %977 = vmatpush2.msra.mxu0 0.0
        %978 = vmatprep.subr.mxu0 0.0
        %979 = vmatpush2.msra.mxu0 0.0
        %980 = vmatprep.subr.mxu0 0.0
        %981 = vmatpush2.msra.mxu0 0.0
        %982 = vmatprep.subr.mxu0 0.0
        %983 = vmatpush2.msra.mxu0 0.0
        %984 = vmatprep.subr.mxu0 0.0
        %985 = vmatpush2.msra.mxu0 0.0
        %986 = vmatprep.subr.mxu0 0.0
        %987 = vmatpush2.msra.mxu0 0.0
        %988 = vmatprep.subr.mxu0 0.0
        %989 = vmatpush2.msra.mxu0 0.0
        %990 = vmatprep.subr.mxu0 0.0
        %991 = vmatpush2.msra.mxu0 0.0
        %992 = vmatprep.mubr.f32.mxu0 0.0
        %993 = vmatmul.mubr.f32.gmra.mxu0 %v672
        %v994 = vpop.f32.mrf.mxu0
        %v995 = vadd.f32 %v926, %v994
        %v996 = vpop.f32.mrf.mxu0
        %997 = vdwg.mxu0
        %s998 = scalar_lea.vmem %s460, 8 [#allocation4]
        %999 = vst.msk [vmem:[%s998] sm:$0xff] %vm573, %v995
        %s1000 = scalar_lea.vmem %s3, 64
        %v1001 = vld [vmem:[%s1000] sm:$0xff]
        %v1002 = vld [vmem:[%s1000 + $0x8] sm:$0xff]
        %v1003 = vld [vmem:[%s1000 + $0x10] sm:$0xff]
        %v1004 = vld [vmem:[%s1000 + $0x18] sm:$0xff]
        %s1005 = scalar_lea.vmem %s6, 2
        %v1006 = vld [vmem:[%s1005] sm:$0x1]
        %v1008 = vlaneseq
        %v1009 = vshrl.u32 %v1008, 7
        %v1010 = vsub.s32 0, %v1009
        %v1011 = vrot.slane %v1006, %v1010
        %1013 = vmatprep.subr.mxu0 0.0
        %1014 = vmatpush1.msra.mxu0 0.0
        %1015 = vmatprep.subr.mxu0 0.0
        %1016 = vmatpush1.msra.mxu0 0.0
        %1017 = vmatprep.subr.mxu0 0.0
        %1018 = vmatpush1.msra.mxu0 0.0
        %1019 = vmatprep.subr.mxu0 0.0
        %1020 = vmatpush1.msra.mxu0 0.0
        %1021 = vmatprep.subr.mxu0 0.0
        %1022 = vmatpush1.msra.mxu0 0.0
        %1023 = vmatprep.subr.mxu0 0.0
        %1024 = vmatpush1.msra.mxu0 0.0
        %1025 = vmatprep.subr.mxu0 0.0
        %1026 = vmatpush1.msra.mxu0 0.0
        %1027 = vmatprep.subr.mxu0 0.0
        %1028 = vmatpush1.msra.mxu0 0.0
        %1029 = vmatprep.subr.mxu0 0.0
        %1030 = vmatpush1.msra.mxu0 0.0
        %1031 = vmatprep.subr.mxu0 0.0
        %1032 = vmatpush1.msra.mxu0 0.0
        %1033 = vmatprep.subr.mxu0 0.0
        %1034 = vmatpush1.msra.mxu0 0.0
        %1035 = vmatprep.subr.mxu0 0.0
        %1036 = vmatpush1.msra.mxu0 0.0
        %1037 = vmatprep.subr.mxu0 0.0
        %1038 = vmatpush1.msra.mxu0 %v1004
        %1039 = vmatprep.subr.mxu0 0.0
        %1040 = vmatpush1.msra.mxu0 %v1003
        %1041 = vmatprep.subr.mxu0 0.0
        %1042 = vmatpush1.msra.mxu0 %v1002
        %1043 = vmatprep.subr.mxu0 0.0
        %1044 = vmatpush1.msra.mxu0 %v1001
        %1045 = vmatprep.subr.mxu0 0.0
        %1046 = vmatpush2.msra.mxu0 0.0
        %1047 = vmatprep.subr.mxu0 0.0
        %1048 = vmatpush2.msra.mxu0 0.0
        %1049 = vmatprep.subr.mxu0 0.0
        %1050 = vmatpush2.msra.mxu0 0.0
        %1051 = vmatprep.subr.mxu0 0.0
        %1052 = vmatpush2.msra.mxu0 0.0
        %1053 = vmatprep.subr.mxu0 0.0
        %1054 = vmatpush2.msra.mxu0 0.0
        %1055 = vmatprep.subr.mxu0 0.0
        %1056 = vmatpush2.msra.mxu0 0.0
        %1057 = vmatprep.subr.mxu0 0.0
        %1058 = vmatpush2.msra.mxu0 0.0
        %1059 = vmatprep.subr.mxu0 0.0
        %1060 = vmatpush2.msra.mxu0 0.0
        %1061 = vmatprep.subr.mxu0 0.0
        %1062 = vmatpush2.msra.mxu0 0.0
        %1063 = vmatprep.subr.mxu0 0.0
        %1064 = vmatpush2.msra.mxu0 0.0
        %1065 = vmatprep.subr.mxu0 0.0
        %1066 = vmatpush2.msra.mxu0 0.0
        %1067 = vmatprep.subr.mxu0 0.0
        %1068 = vmatpush2.msra.mxu0 0.0
        %1069 = vmatprep.subr.mxu0 0.0
        %1070 = vmatpush2.msra.mxu0 0.0
        %1071 = vmatprep.subr.mxu0 0.0
        %1072 = vmatpush2.msra.mxu0 0.0
        %1073 = vmatprep.subr.mxu0 0.0
        %1074 = vmatpush2.msra.mxu0 0.0
        %1075 = vmatprep.subr.mxu0 0.0
        %1076 = vmatpush2.msra.mxu0 0.0
        %1077 = vmatprep.mubr.f32.mxu0 0.0
        %1078 = vmatmul.mubr.f32.gmra.mxu0 %v501
        %v1079 = vpop.f32.mrf.mxu0
        %v1080 = vadd.f32 %v1011, %v1079
        %v1081 = vpop.f32.mrf.mxu0
        %1082 = vdwg.mxu0
        %s1083 = scalar_lea.vmem %s448, 16 [#allocation2]
        %1084 = vst.msk [vmem:[%s1083] sm:$0xff] %vm573, %v1080
        %s1085 = scalar_lea.vmem %s4, 64
        %v1086 = vld [vmem:[%s1085] sm:$0xff]
        %v1087 = vld [vmem:[%s1085 + $0x8] sm:$0xff]
        %v1088 = vld [vmem:[%s1085 + $0x10] sm:$0xff]
        %v1089 = vld [vmem:[%s1085 + $0x18] sm:$0xff]
        %s1090 = scalar_lea.vmem %s7, 2
        %v1091 = vld [vmem:[%s1090] sm:$0x1]
        %v1093 = vlaneseq
        %v1094 = vshrl.u32 %v1093, 7
        %v1095 = vsub.s32 0, %v1094
        %v1096 = vrot.slane %v1091, %v1095
        %1098 = vmatprep.subr.mxu0 0.0
        %1099 = vmatpush1.msra.mxu0 0.0
        %1100 = vmatprep.subr.mxu0 0.0
        %1101 = vmatpush1.msra.mxu0 0.0
        %1102 = vmatprep.subr.mxu0 0.0
        %1103 = vmatpush1.msra.mxu0 0.0
        %1104 = vmatprep.subr.mxu0 0.0
        %1105 = vmatpush1.msra.mxu0 0.0
        %1106 = vmatprep.subr.mxu0 0.0
        %1107 = vmatpush1.msra.mxu0 0.0
        %1108 = vmatprep.subr.mxu0 0.0
        %1109 = vmatpush1.msra.mxu0 0.0
        %1110 = vmatprep.subr.mxu0 0.0
        %1111 = vmatpush1.msra.mxu0 0.0
        %1112 = vmatprep.subr.mxu0 0.0
        %1113 = vmatpush1.msra.mxu0 0.0
        %1114 = vmatprep.subr.mxu0 0.0
        %1115 = vmatpush1.msra.mxu0 0.0
        %1116 = vmatprep.subr.mxu0 0.0
        %1117 = vmatpush1.msra.mxu0 0.0
        %1118 = vmatprep.subr.mxu0 0.0
        %1119 = vmatpush1.msra.mxu0 0.0
        %1120 = vmatprep.subr.mxu0 0.0
        %1121 = vmatpush1.msra.mxu0 0.0
        %1122 = vmatprep.subr.mxu0 0.0
        %1123 = vmatpush1.msra.mxu0 %v1089
        %1124 = vmatprep.subr.mxu0 0.0
        %1125 = vmatpush1.msra.mxu0 %v1088
        %1126 = vmatprep.subr.mxu0 0.0
        %1127 = vmatpush1.msra.mxu0 %v1087
        %1128 = vmatprep.subr.mxu0 0.0
        %1129 = vmatpush1.msra.mxu0 %v1086
        %1130 = vmatprep.subr.mxu0 0.0
        %1131 = vmatpush2.msra.mxu0 0.0
        %1132 = vmatprep.subr.mxu0 0.0
        %1133 = vmatpush2.msra.mxu0 0.0
        %1134 = vmatprep.subr.mxu0 0.0
        %1135 = vmatpush2.msra.mxu0 0.0
        %1136 = vmatprep.subr.mxu0 0.0
        %1137 = vmatpush2.msra.mxu0 0.0
        %1138 = vmatprep.subr.mxu0 0.0
        %1139 = vmatpush2.msra.mxu0 0.0
        %1140 = vmatprep.subr.mxu0 0.0
        %1141 = vmatpush2.msra.mxu0 0.0
        %1142 = vmatprep.subr.mxu0 0.0
        %1143 = vmatpush2.msra.mxu0 0.0
        %1144 = vmatprep.subr.mxu0 0.0
        %1145 = vmatpush2.msra.mxu0 0.0
        %1146 = vmatprep.subr.mxu0 0.0
        %1147 = vmatpush2.msra.mxu0 0.0
        %1148 = vmatprep.subr.mxu0 0.0
        %1149 = vmatpush2.msra.mxu0 0.0
        %1150 = vmatprep.subr.mxu0 0.0
        %1151 = vmatpush2.msra.mxu0 0.0
        %1152 = vmatprep.subr.mxu0 0.0
        %1153 = vmatpush2.msra.mxu0 0.0
        %1154 = vmatprep.subr.mxu0 0.0
        %1155 = vmatpush2.msra.mxu0 0.0
        %1156 = vmatprep.subr.mxu0 0.0
        %1157 = vmatpush2.msra.mxu0 0.0
        %1158 = vmatprep.subr.mxu0 0.0
        %1159 = vmatpush2.msra.mxu0 0.0
        %1160 = vmatprep.subr.mxu0 0.0
        %1161 = vmatpush2.msra.mxu0 0.0
        %1162 = vmatprep.mubr.f32.mxu0 0.0
        %1163 = vmatmul.mubr.f32.gmra.mxu0 %v587
        %v1164 = vpop.f32.mrf.mxu0
        %v1165 = vadd.f32 %v1096, %v1164
        %v1166 = vpop.f32.mrf.mxu0
        %1167 = vdwg.mxu0
        %s1168 = scalar_lea.vmem %s454, 16 [#allocation3]
        %1169 = vst.msk [vmem:[%s1168] sm:$0xff] %vm573, %v1165
        %s1170 = scalar_lea.vmem %s5, 64
        %v1171 = vld [vmem:[%s1170] sm:$0xff]
        %v1172 = vld [vmem:[%s1170 + $0x8] sm:$0xff]
        %v1173 = vld [vmem:[%s1170 + $0x10] sm:$0xff]
        %v1174 = vld [vmem:[%s1170 + $0x18] sm:$0xff]
        %s1175 = scalar_lea.vmem %s8, 2
        %v1176 = vld [vmem:[%s1175] sm:$0x1]
        %v1178 = vlaneseq
        %v1179 = vshrl.u32 %v1178, 7
        %v1180 = vsub.s32 0, %v1179
        %v1181 = vrot.slane %v1176, %v1180
        %1183 = vmatprep.subr.mxu0 0.0
        %1184 = vmatpush1.msra.mxu0 0.0
        %1185 = vmatprep.subr.mxu0 0.0
        %1186 = vmatpush1.msra.mxu0 0.0
        %1187 = vmatprep.subr.mxu0 0.0
        %1188 = vmatpush1.msra.mxu0 0.0
        %1189 = vmatprep.subr.mxu0 0.0
        %1190 = vmatpush1.msra.mxu0 0.0
        %1191 = vmatprep.subr.mxu0 0.0
        %1192 = vmatpush1.msra.mxu0 0.0
        %1193 = vmatprep.subr.mxu0 0.0
        %1194 = vmatpush1.msra.mxu0 0.0
        %1195 = vmatprep.subr.mxu0 0.0
        %1196 = vmatpush1.msra.mxu0 0.0
        %1197 = vmatprep.subr.mxu0 0.0
        %1198 = vmatpush1.msra.mxu0 0.0
        %1199 = vmatprep.subr.mxu0 0.0
        %1200 = vmatpush1.msra.mxu0 0.0
        %1201 = vmatprep.subr.mxu0 0.0
        %1202 = vmatpush1.msra.mxu0 0.0
        %1203 = vmatprep.subr.mxu0 0.0
        %1204 = vmatpush1.msra.mxu0 0.0
        %1205 = vmatprep.subr.mxu0 0.0
        %1206 = vmatpush1.msra.mxu0 0.0
        %1207 = vmatprep.subr.mxu0 0.0
        %1208 = vmatpush1.msra.mxu0 %v1174
        %1209 = vmatprep.subr.mxu0 0.0
        %1210 = vmatpush1.msra.mxu0 %v1173
        %1211 = vmatprep.subr.mxu0 0.0
        %1212 = vmatpush1.msra.mxu0 %v1172
        %1213 = vmatprep.subr.mxu0 0.0
        %1214 = vmatpush1.msra.mxu0 %v1171
        %1215 = vmatprep.subr.mxu0 0.0
        %1216 = vmatpush2.msra.mxu0 0.0
        %1217 = vmatprep.subr.mxu0 0.0
        %1218 = vmatpush2.msra.mxu0 0.0
        %1219 = vmatprep.subr.mxu0 0.0
        %1220 = vmatpush2.msra.mxu0 0.0
        %1221 = vmatprep.subr.mxu0 0.0
        %1222 = vmatpush2.msra.mxu0 0.0
        %1223 = vmatprep.subr.mxu0 0.0
        %1224 = vmatpush2.msra.mxu0 0.0
        %1225 = vmatprep.subr.mxu0 0.0
        %1226 = vmatpush2.msra.mxu0 0.0
        %1227 = vmatprep.subr.mxu0 0.0
        %1228 = vmatpush2.msra.mxu0 0.0
        %1229 = vmatprep.subr.mxu0 0.0
        %1230 = vmatpush2.msra.mxu0 0.0
        %1231 = vmatprep.subr.mxu0 0.0
        %1232 = vmatpush2.msra.mxu0 0.0
        %1233 = vmatprep.subr.mxu0 0.0
        %1234 = vmatpush2.msra.mxu0 0.0
        %1235 = vmatprep.subr.mxu0 0.0
        %1236 = vmatpush2.msra.mxu0 0.0
        %1237 = vmatprep.subr.mxu0 0.0
        %1238 = vmatpush2.msra.mxu0 0.0
        %1239 = vmatprep.subr.mxu0 0.0
        %1240 = vmatpush2.msra.mxu0 0.0
        %1241 = vmatprep.subr.mxu0 0.0
        %1242 = vmatpush2.msra.mxu0 0.0
        %1243 = vmatprep.subr.mxu0 0.0
        %1244 = vmatpush2.msra.mxu0 0.0
        %1245 = vmatprep.subr.mxu0 0.0
        %1246 = vmatpush2.msra.mxu0 0.0
        %1247 = vmatprep.mubr.f32.mxu0 0.0
        %1248 = vmatmul.mubr.f32.gmra.mxu0 %v672
        %v1249 = vpop.f32.mrf.mxu0
        %v1250 = vadd.f32 %v1181, %v1249
        %v1251 = vpop.f32.mrf.mxu0
        %1252 = vdwg.mxu0
        %s1253 = scalar_lea.vmem %s460, 16 [#allocation4]
        %1254 = vst.msk [vmem:[%s1253] sm:$0xff] %vm573, %v1250
        %s1255 = scalar_lea.vmem %s3, 96
        %v1256 = vld [vmem:[%s1255] sm:$0xff]
        %v1257 = vld [vmem:[%s1255 + $0x8] sm:$0xff]
        %v1258 = vld [vmem:[%s1255 + $0x10] sm:$0xff]
        %v1259 = vld [vmem:[%s1255 + $0x18] sm:$0xff]
        %s1260 = scalar_lea.vmem %s6, 3
        %v1261 = vld [vmem:[%s1260] sm:$0x1]
        %v1263 = vlaneseq
        %v1264 = vshrl.u32 %v1263, 7
        %v1265 = vsub.s32 0, %v1264
        %v1266 = vrot.slane %v1261, %v1265
        %1268 = vmatprep.subr.mxu0 0.0
        %1269 = vmatpush1.msra.mxu0 0.0
        %1270 = vmatprep.subr.mxu0 0.0
        %1271 = vmatpush1.msra.mxu0 0.0
        %1272 = vmatprep.subr.mxu0 0.0
        %1273 = vmatpush1.msra.mxu0 0.0
        %1274 = vmatprep.subr.mxu0 0.0
        %1275 = vmatpush1.msra.mxu0 0.0
        %1276 = vmatprep.subr.mxu0 0.0
        %1277 = vmatpush1.msra.mxu0 0.0
        %1278 = vmatprep.subr.mxu0 0.0
        %1279 = vmatpush1.msra.mxu0 0.0
        %1280 = vmatprep.subr.mxu0 0.0
        %1281 = vmatpush1.msra.mxu0 0.0
        %1282 = vmatprep.subr.mxu0 0.0
        %1283 = vmatpush1.msra.mxu0 0.0
        %1284 = vmatprep.subr.mxu0 0.0
        %1285 = vmatpush1.msra.mxu0 0.0
        %1286 = vmatprep.subr.mxu0 0.0
        %1287 = vmatpush1.msra.mxu0 0.0
        %1288 = vmatprep.subr.mxu0 0.0
        %1289 = vmatpush1.msra.mxu0 0.0
        %1290 = vmatprep.subr.mxu0 0.0
        %1291 = vmatpush1.msra.mxu0 0.0
        %1292 = vmatprep.subr.mxu0 0.0
        %1293 = vmatpush1.msra.mxu0 %v1259
        %1294 = vmatprep.subr.mxu0 0.0
        %1295 = vmatpush1.msra.mxu0 %v1258
        %1296 = vmatprep.subr.mxu0 0.0
        %1297 = vmatpush1.msra.mxu0 %v1257
        %1298 = vmatprep.subr.mxu0 0.0
        %1299 = vmatpush1.msra.mxu0 %v1256
        %1300 = vmatprep.subr.mxu0 0.0
        %1301 = vmatpush2.msra.mxu0 0.0
        %1302 = vmatprep.subr.mxu0 0.0
        %1303 = vmatpush2.msra.mxu0 0.0
        %1304 = vmatprep.subr.mxu0 0.0
        %1305 = vmatpush2.msra.mxu0 0.0
        %1306 = vmatprep.subr.mxu0 0.0
        %1307 = vmatpush2.msra.mxu0 0.0
        %1308 = vmatprep.subr.mxu0 0.0
        %1309 = vmatpush2.msra.mxu0 0.0
        %1310 = vmatprep.subr.mxu0 0.0
        %1311 = vmatpush2.msra.mxu0 0.0
        %1312 = vmatprep.subr.mxu0 0.0
        %1313 = vmatpush2.msra.mxu0 0.0
        %1314 = vmatprep.subr.mxu0 0.0
        %1315 = vmatpush2.msra.mxu0 0.0
        %1316 = vmatprep.subr.mxu0 0.0
        %1317 = vmatpush2.msra.mxu0 0.0
        %1318 = vmatprep.subr.mxu0 0.0
        %1319 = vmatpush2.msra.mxu0 0.0
        %1320 = vmatprep.subr.mxu0 0.0
        %1321 = vmatpush2.msra.mxu0 0.0
        %1322 = vmatprep.subr.mxu0 0.0
        %1323 = vmatpush2.msra.mxu0 0.0
        %1324 = vmatprep.subr.mxu0 0.0
        %1325 = vmatpush2.msra.mxu0 0.0
        %1326 = vmatprep.subr.mxu0 0.0
        %1327 = vmatpush2.msra.mxu0 0.0
        %1328 = vmatprep.subr.mxu0 0.0
        %1329 = vmatpush2.msra.mxu0 0.0
        %1330 = vmatprep.subr.mxu0 0.0
        %1331 = vmatpush2.msra.mxu0 0.0
        %1332 = vmatprep.mubr.f32.mxu0 0.0
        %1333 = vmatmul.mubr.f32.gmra.mxu0 %v501
        %v1334 = vpop.f32.mrf.mxu0
        %v1335 = vadd.f32 %v1266, %v1334
        %v1336 = vpop.f32.mrf.mxu0
        %1337 = vdwg.mxu0
        %s1338 = scalar_lea.vmem %s448, 24 [#allocation2]
        %1339 = vst.msk [vmem:[%s1338] sm:$0xff] %vm573, %v1335
        %s1340 = scalar_lea.vmem %s4, 96
        %v1341 = vld [vmem:[%s1340] sm:$0xff]
        %v1342 = vld [vmem:[%s1340 + $0x8] sm:$0xff]
        %v1343 = vld [vmem:[%s1340 + $0x10] sm:$0xff]
        %v1344 = vld [vmem:[%s1340 + $0x18] sm:$0xff]
        %s1345 = scalar_lea.vmem %s7, 3
        %v1346 = vld [vmem:[%s1345] sm:$0x1]
        %v1348 = vlaneseq
        %v1349 = vshrl.u32 %v1348, 7
        %v1350 = vsub.s32 0, %v1349
        %v1351 = vrot.slane %v1346, %v1350
        %1353 = vmatprep.subr.mxu0 0.0
        %1354 = vmatpush1.msra.mxu0 0.0
        %1355 = vmatprep.subr.mxu0 0.0
        %1356 = vmatpush1.msra.mxu0 0.0
        %1357 = vmatprep.subr.mxu0 0.0
        %1358 = vmatpush1.msra.mxu0 0.0
        %1359 = vmatprep.subr.mxu0 0.0
        %1360 = vmatpush1.msra.mxu0 0.0
        %1361 = vmatprep.subr.mxu0 0.0
        %1362 = vmatpush1.msra.mxu0 0.0
        %1363 = vmatprep.subr.mxu0 0.0
        %1364 = vmatpush1.msra.mxu0 0.0
        %1365 = vmatprep.subr.mxu0 0.0
        %1366 = vmatpush1.msra.mxu0 0.0
        %1367 = vmatprep.subr.mxu0 0.0
        %1368 = vmatpush1.msra.mxu0 0.0
        %1369 = vmatprep.subr.mxu0 0.0
        %1370 = vmatpush1.msra.mxu0 0.0
        %1371 = vmatprep.subr.mxu0 0.0
        %1372 = vmatpush1.msra.mxu0 0.0
        %1373 = vmatprep.subr.mxu0 0.0
        %1374 = vmatpush1.msra.mxu0 0.0
        %1375 = vmatprep.subr.mxu0 0.0
        %1376 = vmatpush1.msra.mxu0 0.0
        %1377 = vmatprep.subr.mxu0 0.0
        %1378 = vmatpush1.msra.mxu0 %v1344
        %1379 = vmatprep.subr.mxu0 0.0
        %1380 = vmatpush1.msra.mxu0 %v1343
        %1381 = vmatprep.subr.mxu0 0.0
        %1382 = vmatpush1.msra.mxu0 %v1342
        %1383 = vmatprep.subr.mxu0 0.0
        %1384 = vmatpush1.msra.mxu0 %v1341
        %1385 = vmatprep.subr.mxu0 0.0
        %1386 = vmatpush2.msra.mxu0 0.0
        %1387 = vmatprep.subr.mxu0 0.0
        %1388 = vmatpush2.msra.mxu0 0.0
        %1389 = vmatprep.subr.mxu0 0.0
        %1390 = vmatpush2.msra.mxu0 0.0
        %1391 = vmatprep.subr.mxu0 0.0
        %1392 = vmatpush2.msra.mxu0 0.0
        %1393 = vmatprep.subr.mxu0 0.0
        %1394 = vmatpush2.msra.mxu0 0.0
        %1395 = vmatprep.subr.mxu0 0.0
        %1396 = vmatpush2.msra.mxu0 0.0
        %1397 = vmatprep.subr.mxu0 0.0
        %1398 = vmatpush2.msra.mxu0 0.0
        %1399 = vmatprep.subr.mxu0 0.0
        %1400 = vmatpush2.msra.mxu0 0.0
        %1401 = vmatprep.subr.mxu0 0.0
        %1402 = vmatpush2.msra.mxu0 0.0
        %1403 = vmatprep.subr.mxu0 0.0
        %1404 = vmatpush2.msra.mxu0 0.0
        %1405 = vmatprep.subr.mxu0 0.0
        %1406 = vmatpush2.msra.mxu0 0.0
        %1407 = vmatprep.subr.mxu0 0.0
        %1408 = vmatpush2.msra.mxu0 0.0
        %1409 = vmatprep.subr.mxu0 0.0
        %1410 = vmatpush2.msra.mxu0 0.0
        %1411 = vmatprep.subr.mxu0 0.0
        %1412 = vmatpush2.msra.mxu0 0.0
        %1413 = vmatprep.subr.mxu0 0.0
        %1414 = vmatpush2.msra.mxu0 0.0
        %1415 = vmatprep.subr.mxu0 0.0
        %1416 = vmatpush2.msra.mxu0 0.0
        %1417 = vmatprep.mubr.f32.mxu0 0.0
        %1418 = vmatmul.mubr.f32.gmra.mxu0 %v587
        %v1419 = vpop.f32.mrf.mxu0
        %v1420 = vadd.f32 %v1351, %v1419
        %v1421 = vpop.f32.mrf.mxu0
        %1422 = vdwg.mxu0
        %s1423 = scalar_lea.vmem %s454, 24 [#allocation3]
        %1424 = vst.msk [vmem:[%s1423] sm:$0xff] %vm573, %v1420
        %s1425 = scalar_lea.vmem %s5, 96
        %v1426 = vld [vmem:[%s1425] sm:$0xff]
        %v1427 = vld [vmem:[%s1425 + $0x8] sm:$0xff]
        %v1428 = vld [vmem:[%s1425 + $0x10] sm:$0xff]
        %v1429 = vld [vmem:[%s1425 + $0x18] sm:$0xff]
        %s1430 = scalar_lea.vmem %s8, 3
        %v1431 = vld [vmem:[%s1430] sm:$0x1]
        %v1433 = vlaneseq
        %v1434 = vshrl.u32 %v1433, 7
        %v1435 = vsub.s32 0, %v1434
        %v1436 = vrot.slane %v1431, %v1435
        %1438 = vmatprep.subr.mxu0 0.0
        %1439 = vmatpush1.msra.mxu0 0.0
        %1440 = vmatprep.subr.mxu0 0.0
        %1441 = vmatpush1.msra.mxu0 0.0
        %1442 = vmatprep.subr.mxu0 0.0
        %1443 = vmatpush1.msra.mxu0 0.0
        %1444 = vmatprep.subr.mxu0 0.0
        %1445 = vmatpush1.msra.mxu0 0.0
        %1446 = vmatprep.subr.mxu0 0.0
        %1447 = vmatpush1.msra.mxu0 0.0
        %1448 = vmatprep.subr.mxu0 0.0
        %1449 = vmatpush1.msra.mxu0 0.0
        %1450 = vmatprep.subr.mxu0 0.0
        %1451 = vmatpush1.msra.mxu0 0.0
        %1452 = vmatprep.subr.mxu0 0.0
        %1453 = vmatpush1.msra.mxu0 0.0
        %1454 = vmatprep.subr.mxu0 0.0
        %1455 = vmatpush1.msra.mxu0 0.0
        %1456 = vmatprep.subr.mxu0 0.0
        %1457 = vmatpush1.msra.mxu0 0.0
        %1458 = vmatprep.subr.mxu0 0.0
        %1459 = vmatpush1.msra.mxu0 0.0
        %1460 = vmatprep.subr.mxu0 0.0
        %1461 = vmatpush1.msra.mxu0 0.0
        %1462 = vmatprep.subr.mxu0 0.0
        %1463 = vmatpush1.msra.mxu0 %v1429
        %1464 = vmatprep.subr.mxu0 0.0
        %1465 = vmatpush1.msra.mxu0 %v1428
        %1466 = vmatprep.subr.mxu0 0.0
        %1467 = vmatpush1.msra.mxu0 %v1427
        %1468 = vmatprep.subr.mxu0 0.0
        %1469 = vmatpush1.msra.mxu0 %v1426
        %1470 = vmatprep.subr.mxu0 0.0
        %1471 = vmatpush2.msra.mxu0 0.0
        %1472 = vmatprep.subr.mxu0 0.0
        %1473 = vmatpush2.msra.mxu0 0.0
        %1474 = vmatprep.subr.mxu0 0.0
        %1475 = vmatpush2.msra.mxu0 0.0
        %1476 = vmatprep.subr.mxu0 0.0
        %1477 = vmatpush2.msra.mxu0 0.0
        %1478 = vmatprep.subr.mxu0 0.0
        %1479 = vmatpush2.msra.mxu0 0.0
        %1480 = vmatprep.subr.mxu0 0.0
        %1481 = vmatpush2.msra.mxu0 0.0
        %1482 = vmatprep.subr.mxu0 0.0
        %1483 = vmatpush2.msra.mxu0 0.0
        %1484 = vmatprep.subr.mxu0 0.0
        %1485 = vmatpush2.msra.mxu0 0.0
        %1486 = vmatprep.subr.mxu0 0.0
        %1487 = vmatpush2.msra.mxu0 0.0
        %1488 = vmatprep.subr.mxu0 0.0
        %1489 = vmatpush2.msra.mxu0 0.0
        %1490 = vmatprep.subr.mxu0 0.0
        %1491 = vmatpush2.msra.mxu0 0.0
        %1492 = vmatprep.subr.mxu0 0.0
        %1493 = vmatpush2.msra.mxu0 0.0
        %1494 = vmatprep.subr.mxu0 0.0
        %1495 = vmatpush2.msra.mxu0 0.0
        %1496 = vmatprep.subr.mxu0 0.0
        %1497 = vmatpush2.msra.mxu0 0.0
        %1498 = vmatprep.subr.mxu0 0.0
        %1499 = vmatpush2.msra.mxu0 0.0
        %1500 = vmatprep.subr.mxu0 0.0
        %1501 = vmatpush2.msra.mxu0 0.0
        %1502 = vmatprep.mubr.f32.mxu0 0.0
        %1503 = vmatmul.mubr.f32.gmra.mxu0 %v672
        %v1504 = vpop.f32.mrf.mxu0
        %v1505 = vadd.f32 %v1436, %v1504
        %v1506 = vpop.f32.mrf.mxu0
        %1507 = vdwg.mxu0
        %s1508 = scalar_lea.vmem %s460, 24 [#allocation4]
        %1509 = vst.msk [vmem:[%s1508] sm:$0xff] %vm573, %v1505
        %s1510 = sand.u32 %s255, 1
        %s1511 = sand.u32 %s255, 1
        %s1512 = smul.addr %s1511, 32
        %s1513 = scalar_lea.vmem [#allocation2], %s1512
        %s1514 = sand.u32 %s283, 1
        %s1515 = sand.u32 %s283, 1
        %s1516 = smul.addr %s1515, 32
        %s1517 = scalar_lea.vmem [#allocation3], %s1516
        %s1518 = sand.u32 %s311, 1
        %s1519 = sand.u32 %s311, 1
        %s1520 = smul.addr %s1519, 32
        %s1521 = scalar_lea.vmem [#allocation4], %s1520
        // Predicated region
        $region57: #{tpu_custom_call.1} parent=55 // pred_check
          %p1522 = pneg %p265
        $region58: #{tpu_custom_call.1} parent=55 // pred_check_branch
          %1524 = sbr.rel (%p1522) target = $region60
        $region59: #{tpu_custom_call.1} parent=55 // pred_region
          %s1525 = smul.addr %s27, 8
          %s1526 = sadd.s32 %s28, %s1525
          %s1527 = smul.addr %s1526, 8
          %s1528 = scalar_lea.vmem %s9, %s1527
          // Predicated region
          $region61: #{tpu_custom_call.1} parent=59 // pred_check
            _
          $region62: #{tpu_custom_call.1} parent=59 // pred_check_branch
            %1530 = sbr.rel (0) target = $region64
          $region63: #{tpu_custom_call.1} parent=59 // pred_region
            // Predicated region
            $region65: #{tpu_custom_call.1} parent=63 // pred_check
              _
            $region66: #{tpu_custom_call.1} parent=63 // pred_check_branch
              %1532 = sbr.rel (0) target = $region68
            $region67: #{tpu_custom_call.1} parent=63 // pred_region
              // Predicated region
              $region80: #{tpu_custom_call.1} parent=67 // pred_check
                _
              $region81: #{tpu_custom_call.1} parent=67 // pred_check_branch
                %1554 = sbr.rel (0) target = $region83
              $region82: #{tpu_custom_call.1} parent=67 // pred_region
                loop: start=0, step=1, limit=1
                $region84: #{tpu_custom_call.1} parent=82 // loop_pre_header
                  _
                $region85: #{tpu_custom_call.1} parent=82 // loop_header
                  %s1556 = sphi 0, %s1560
                  %p1557 = scmp.ge.s32.totalorder %s1556, 1
                  %s1561 = sphi %s1513, %s1513
                  %s1562 = sphi %s1528, %s1528
                $region86: #{tpu_custom_call.1} parent=82 // loop_header_branch
                  %1559 = sbr.rel (%p1557) target = $region90
                $region87: #{tpu_custom_call.1} parent=82 // loop_body
                  %v1563 = vld [vmem:[%s1561] sm:$0xff]
                  %1564 = vst [vmem:[%s1562] sm:$0xff] %v1563
                  %v1565 = vld [vmem:[%s1561 + $0x8] sm:$0xff]
                  %1566 = vst [vmem:[%s1562 + $0x10] sm:$0xff] %v1565
                  %v1567 = vld [vmem:[%s1561 + $0x10] sm:$0xff]
                  %1568 = vst [vmem:[%s1562 + $0x20] sm:$0xff] %v1567
                  %v1569 = vld [vmem:[%s1561 + $0x18] sm:$0xff]
                  %1570 = vst [vmem:[%s1562 + $0x30] sm:$0xff] %v1569
                $region88: #{tpu_custom_call.1} parent=82 // loop_footer
                  %s1560 = sadd.s32 1, %s1556
                $region89: #{tpu_custom_call.1} parent=82 // loop_footer_branch
                  %1555 = sbr.rel target = $region85
                $region90: #{tpu_custom_call.1} parent=82 // loop_exit
                  _
              $region83: #{tpu_custom_call.1} parent=67 // pred_fallthru
                _
              // Predicated region
              $region91: #{tpu_custom_call.1} parent=67 // pred_check
                _
              $region92: #{tpu_custom_call.1} parent=67 // pred_check_branch
                %1572 = sbr.rel target = $region94
              $region93: #{tpu_custom_call.1} parent=67 // pred_region
                _
              $region94: #{tpu_custom_call.1} parent=67 // pred_fallthru
                _
            $region68: #{tpu_custom_call.1} parent=63 // pred_fallthru
              _
            // Predicated region
            $region69: #{tpu_custom_call.1} parent=63 // pred_check
              _
            $region70: #{tpu_custom_call.1} parent=63 // pred_check_branch
              %1534 = sbr.rel target = $region72
            $region71: #{tpu_custom_call.1} parent=63 // pred_region
              %s1536 = ssub.s32 256, 1
              loop: start=0, step=1, limit=1
              $region73: #{tpu_custom_call.1} parent=71 // loop_pre_header
                _
              $region74: #{tpu_custom_call.1} parent=71 // loop_header
                %s1538 = sphi 0, %s1542
                %p1539 = scmp.ge.s32.totalorder %s1538, 1
                %s1543 = sphi %s1513, %s1513
                %s1544 = sphi %s1528, %s1528
              $region75: #{tpu_custom_call.1} parent=71 // loop_header_branch
                %1541 = sbr.rel (%p1539) target = $region79
              $region76: #{tpu_custom_call.1} parent=71 // loop_body
                %v1545 = vld [vmem:[%s1543] sm:%s1536]
                %1546 = vst [vmem:[%s1544] sm:%s1536] %v1545
                %v1547 = vld [vmem:[%s1543 + $0x8] sm:%s1536]
                %1548 = vst [vmem:[%s1544 + $0x10] sm:%s1536] %v1547
                %v1549 = vld [vmem:[%s1543 + $0x10] sm:%s1536]
                %1550 = vst [vmem:[%s1544 + $0x20] sm:%s1536] %v1549
                %v1551 = vld [vmem:[%s1543 + $0x18] sm:%s1536]
                %1552 = vst [vmem:[%s1544 + $0x30] sm:%s1536] %v1551
              $region77: #{tpu_custom_call.1} parent=71 // loop_footer
                %s1542 = sadd.s32 1, %s1538
              $region78: #{tpu_custom_call.1} parent=71 // loop_footer_branch
                %1537 = sbr.rel target = $region74
              $region79: #{tpu_custom_call.1} parent=71 // loop_exit
                _
            $region72: #{tpu_custom_call.1} parent=63 // pred_fallthru
              _
          $region64: #{tpu_custom_call.1} parent=59 // pred_fallthru
            _
          %1573 = vnop
        $region60: #{tpu_custom_call.1} parent=55 // pred_fallthru
          _
        // Predicated region
        $region95: #{tpu_custom_call.1} parent=55 // pred_check
          %p1574 = pneg %p293
        $region96: #{tpu_custom_call.1} parent=55 // pred_check_branch
          %1576 = sbr.rel (%p1574) target = $region98
        $region97: #{tpu_custom_call.1} parent=55 // pred_region
          %s1577 = smul.addr %s27, 8
          %s1578 = sadd.s32 %s28, %s1577
          %s1579 = smul.addr %s1578, 8
          %s1580 = scalar_lea.vmem %s10, %s1579
          // Predicated region
          $region99: #{tpu_custom_call.1} parent=97 // pred_check
            _
          $region100: #{tpu_custom_call.1} parent=97 // pred_check_branch
            %1582 = sbr.rel (0) target = $region102
          $region101: #{tpu_custom_call.1} parent=97 // pred_region
            // Predicated region
            $region103: #{tpu_custom_call.1} parent=101 // pred_check
              _
            $region104: #{tpu_custom_call.1} parent=101 // pred_check_branch
              %1584 = sbr.rel (0) target = $region106
            $region105: #{tpu_custom_call.1} parent=101 // pred_region
              // Predicated region
              $region118: #{tpu_custom_call.1} parent=105 // pred_check
                _
              $region119: #{tpu_custom_call.1} parent=105 // pred_check_branch
                %1606 = sbr.rel (0) target = $region121
              $region120: #{tpu_custom_call.1} parent=105 // pred_region
                loop: start=0, step=1, limit=1
                $region122: #{tpu_custom_call.1} parent=120 // loop_pre_header
                  _
                $region123: #{tpu_custom_call.1} parent=120 // loop_header
                  %s1608 = sphi 0, %s1612
                  %p1609 = scmp.ge.s32.totalorder %s1608, 1
                  %s1613 = sphi %s1517, %s1517
                  %s1614 = sphi %s1580, %s1580
                $region124: #{tpu_custom_call.1} parent=120 // loop_header_branch
                  %1611 = sbr.rel (%p1609) target = $region128
                $region125: #{tpu_custom_call.1} parent=120 // loop_body
                  %v1615 = vld [vmem:[%s1613] sm:$0xff]
                  %1616 = vst [vmem:[%s1614] sm:$0xff] %v1615
                  %v1617 = vld [vmem:[%s1613 + $0x8] sm:$0xff]
                  %1618 = vst [vmem:[%s1614 + $0x10] sm:$0xff] %v1617
                  %v1619 = vld [vmem:[%s1613 + $0x10] sm:$0xff]
                  %1620 = vst [vmem:[%s1614 + $0x20] sm:$0xff] %v1619
                  %v1621 = vld [vmem:[%s1613 + $0x18] sm:$0xff]
                  %1622 = vst [vmem:[%s1614 + $0x30] sm:$0xff] %v1621
                $region126: #{tpu_custom_call.1} parent=120 // loop_footer
                  %s1612 = sadd.s32 1, %s1608
                $region127: #{tpu_custom_call.1} parent=120 // loop_footer_branch
                  %1607 = sbr.rel target = $region123
                $region128: #{tpu_custom_call.1} parent=120 // loop_exit
                  _
              $region121: #{tpu_custom_call.1} parent=105 // pred_fallthru
                _
              // Predicated region
              $region129: #{tpu_custom_call.1} parent=105 // pred_check
                _
              $region130: #{tpu_custom_call.1} parent=105 // pred_check_branch
                %1624 = sbr.rel target = $region132
              $region131: #{tpu_custom_call.1} parent=105 // pred_region
                _
              $region132: #{tpu_custom_call.1} parent=105 // pred_fallthru
                _
            $region106: #{tpu_custom_call.1} parent=101 // pred_fallthru
              _
            // Predicated region
            $region107: #{tpu_custom_call.1} parent=101 // pred_check
              _
            $region108: #{tpu_custom_call.1} parent=101 // pred_check_branch
              %1586 = sbr.rel target = $region110
            $region109: #{tpu_custom_call.1} parent=101 // pred_region
              %s1588 = ssub.s32 256, 1
              loop: start=0, step=1, limit=1
              $region111: #{tpu_custom_call.1} parent=109 // loop_pre_header
                _
              $region112: #{tpu_custom_call.1} parent=109 // loop_header
                %s1590 = sphi 0, %s1594
                %p1591 = scmp.ge.s32.totalorder %s1590, 1
                %s1595 = sphi %s1517, %s1517
                %s1596 = sphi %s1580, %s1580
              $region113: #{tpu_custom_call.1} parent=109 // loop_header_branch
                %1593 = sbr.rel (%p1591) target = $region117
              $region114: #{tpu_custom_call.1} parent=109 // loop_body
                %v1597 = vld [vmem:[%s1595] sm:%s1588]
                %1598 = vst [vmem:[%s1596] sm:%s1588] %v1597
                %v1599 = vld [vmem:[%s1595 + $0x8] sm:%s1588]
                %1600 = vst [vmem:[%s1596 + $0x10] sm:%s1588] %v1599
                %v1601 = vld [vmem:[%s1595 + $0x10] sm:%s1588]
                %1602 = vst [vmem:[%s1596 + $0x20] sm:%s1588] %v1601
                %v1603 = vld [vmem:[%s1595 + $0x18] sm:%s1588]
                %1604 = vst [vmem:[%s1596 + $0x30] sm:%s1588] %v1603
              $region115: #{tpu_custom_call.1} parent=109 // loop_footer
                %s1594 = sadd.s32 1, %s1590
              $region116: #{tpu_custom_call.1} parent=109 // loop_footer_branch
                %1589 = sbr.rel target = $region112
              $region117: #{tpu_custom_call.1} parent=109 // loop_exit
                _
            $region110: #{tpu_custom_call.1} parent=101 // pred_fallthru
              _
          $region102: #{tpu_custom_call.1} parent=97 // pred_fallthru
            _
          %1625 = vnop
        $region98: #{tpu_custom_call.1} parent=55 // pred_fallthru
          _
        // Predicated region
        $region133: #{tpu_custom_call.1} parent=55 // pred_check
          %p1626 = pneg %p321
        $region134: #{tpu_custom_call.1} parent=55 // pred_check_branch
          %1628 = sbr.rel (%p1626) target = $region136
        $region135: #{tpu_custom_call.1} parent=55 // pred_region
          %s1629 = smul.addr %s27, 8
          %s1630 = sadd.s32 %s28, %s1629
          %s1631 = smul.addr %s1630, 8
          %s1632 = scalar_lea.vmem %s11, %s1631
          // Predicated region
          $region137: #{tpu_custom_call.1} parent=135 // pred_check
            _
          $region138: #{tpu_custom_call.1} parent=135 // pred_check_branch
            %1634 = sbr.rel (0) target = $region140
          $region139: #{tpu_custom_call.1} parent=135 // pred_region
            // Predicated region
            $region141: #{tpu_custom_call.1} parent=139 // pred_check
              _
            $region142: #{tpu_custom_call.1} parent=139 // pred_check_branch
              %1636 = sbr.rel (0) target = $region144
            $region143: #{tpu_custom_call.1} parent=139 // pred_region
              // Predicated region
              $region156: #{tpu_custom_call.1} parent=143 // pred_check
                _
              $region157: #{tpu_custom_call.1} parent=143 // pred_check_branch
                %1658 = sbr.rel (0) target = $region159
              $region158: #{tpu_custom_call.1} parent=143 // pred_region
                loop: start=0, step=1, limit=1
                $region160: #{tpu_custom_call.1} parent=158 // loop_pre_header
                  _
                $region161: #{tpu_custom_call.1} parent=158 // loop_header
                  %s1660 = sphi 0, %s1664
                  %p1661 = scmp.ge.s32.totalorder %s1660, 1
                  %s1665 = sphi %s1521, %s1521
                  %s1666 = sphi %s1632, %s1632
                $region162: #{tpu_custom_call.1} parent=158 // loop_header_branch
                  %1663 = sbr.rel (%p1661) target = $region166
                $region163: #{tpu_custom_call.1} parent=158 // loop_body
                  %v1667 = vld [vmem:[%s1665] sm:$0xff]
                  %1668 = vst [vmem:[%s1666] sm:$0xff] %v1667
                  %v1669 = vld [vmem:[%s1665 + $0x8] sm:$0xff]
                  %1670 = vst [vmem:[%s1666 + $0x10] sm:$0xff] %v1669
                  %v1671 = vld [vmem:[%s1665 + $0x10] sm:$0xff]
                  %1672 = vst [vmem:[%s1666 + $0x20] sm:$0xff] %v1671
                  %v1673 = vld [vmem:[%s1665 + $0x18] sm:$0xff]
                  %1674 = vst [vmem:[%s1666 + $0x30] sm:$0xff] %v1673
                $region164: #{tpu_custom_call.1} parent=158 // loop_footer
                  %s1664 = sadd.s32 1, %s1660
                $region165: #{tpu_custom_call.1} parent=158 // loop_footer_branch
                  %1659 = sbr.rel target = $region161
                $region166: #{tpu_custom_call.1} parent=158 // loop_exit
                  _
              $region159: #{tpu_custom_call.1} parent=143 // pred_fallthru
                _
              // Predicated region
              $region167: #{tpu_custom_call.1} parent=143 // pred_check
                _
              $region168: #{tpu_custom_call.1} parent=143 // pred_check_branch
                %1676 = sbr.rel target = $region170
              $region169: #{tpu_custom_call.1} parent=143 // pred_region
                _
              $region170: #{tpu_custom_call.1} parent=143 // pred_fallthru
                _
            $region144: #{tpu_custom_call.1} parent=139 // pred_fallthru
              _
            // Predicated region
            $region145: #{tpu_custom_call.1} parent=139 // pred_check
              _
            $region146: #{tpu_custom_call.1} parent=139 // pred_check_branch
              %1638 = sbr.rel target = $region148
            $region147: #{tpu_custom_call.1} parent=139 // pred_region
              %s1640 = ssub.s32 256, 1
              loop: start=0, step=1, limit=1
              $region149: #{tpu_custom_call.1} parent=147 // loop_pre_header
                _
              $region150: #{tpu_custom_call.1} parent=147 // loop_header
                %s1642 = sphi 0, %s1646
                %p1643 = scmp.ge.s32.totalorder %s1642, 1
                %s1647 = sphi %s1521, %s1521
                %s1648 = sphi %s1632, %s1632
              $region151: #{tpu_custom_call.1} parent=147 // loop_header_branch
                %1645 = sbr.rel (%p1643) target = $region155
              $region152: #{tpu_custom_call.1} parent=147 // loop_body
                %v1649 = vld [vmem:[%s1647] sm:%s1640]
                %1650 = vst [vmem:[%s1648] sm:%s1640] %v1649
                %v1651 = vld [vmem:[%s1647 + $0x8] sm:%s1640]
                %1652 = vst [vmem:[%s1648 + $0x10] sm:%s1640] %v1651
                %v1653 = vld [vmem:[%s1647 + $0x10] sm:%s1640]
                %1654 = vst [vmem:[%s1648 + $0x20] sm:%s1640] %v1653
                %v1655 = vld [vmem:[%s1647 + $0x18] sm:%s1640]
                %1656 = vst [vmem:[%s1648 + $0x30] sm:%s1640] %v1655
              $region153: #{tpu_custom_call.1} parent=147 // loop_footer
                %s1646 = sadd.s32 1, %s1642
              $region154: #{tpu_custom_call.1} parent=147 // loop_footer_branch
                %1641 = sbr.rel target = $region150
              $region155: #{tpu_custom_call.1} parent=147 // loop_exit
                _
            $region148: #{tpu_custom_call.1} parent=139 // pred_fallthru
              _
          $region140: #{tpu_custom_call.1} parent=135 // pred_fallthru
            _
          %1677 = vnop
        $region136: #{tpu_custom_call.1} parent=55 // pred_fallthru
          _
      $region56: #{tpu_custom_call.1} parent=5 // pred_fallthru
        _
      %p1678 = scmp.le.s32.totalorder 2, %s18
      // Predicated region
      $region171: #{tpu_custom_call.1} parent=5 // pred_check
        %p1679 = pneg %p1678
      $region172: #{tpu_custom_call.1} parent=5 // pred_check_branch
        %1681 = sbr.rel (%p1679) target = $region174
      $region173: #{tpu_custom_call.1} parent=5 // pred_region
        %s1682 = ssub.s32 %s18, 2
        // Predicated region
        $region175: #{tpu_custom_call.1} parent=173 // pred_check
          %p1683 = pneg %p271
        $region176: #{tpu_custom_call.1} parent=173 // pred_check_branch
          %1685 = sbr.rel (%p1683) target = $region178
        $region177: #{tpu_custom_call.1} parent=173 // pred_region
          %s1686 = sand.u32 %s256, 1
          %s1687 = sand.u32 %s256, 1
          %s1688 = smul.addr %s1687, 32
          %s1689 = scalar_lea.vmem [#allocation2], %s1688
        $region178: #{tpu_custom_call.1} parent=173 // pred_fallthru
          _
        // Predicated region
        $region179: #{tpu_custom_call.1} parent=173 // pred_check
          %p1690 = pneg %p299
        $region180: #{tpu_custom_call.1} parent=173 // pred_check_branch
          %1692 = sbr.rel (%p1690) target = $region182
        $region181: #{tpu_custom_call.1} parent=173 // pred_region
          %s1693 = sand.u32 %s284, 1
          %s1694 = sand.u32 %s284, 1
          %s1695 = smul.addr %s1694, 32
          %s1696 = scalar_lea.vmem [#allocation3], %s1695
        $region182: #{tpu_custom_call.1} parent=173 // pred_fallthru
          _
        // Predicated region
        $region183: #{tpu_custom_call.1} parent=173 // pred_check
          %p1697 = pneg %p327
        $region184: #{tpu_custom_call.1} parent=173 // pred_check_branch
          %1699 = sbr.rel (%p1697) target = $region186
        $region185: #{tpu_custom_call.1} parent=173 // pred_region
          %s1700 = sand.u32 %s312, 1
          %s1701 = sand.u32 %s312, 1
          %s1702 = smul.addr %s1701, 32
          %s1703 = scalar_lea.vmem [#allocation4], %s1702
        $region186: #{tpu_custom_call.1} parent=173 // pred_fallthru
          _
      $region174: #{tpu_custom_call.1} parent=5 // pred_fallthru
        _
    $region6: #{tpu_custom_call.1} parent=1 // loop_footer
      %s22 = sadd.s32 1, %s18
    $region7: #{tpu_custom_call.1} parent=1 // loop_footer_branch
      %17 = sbr.rel target = $region3
    $region8: #{tpu_custom_call.1} parent=1 // loop_exit
      _

</llo_original>
